<compile_context>
chip_gen: v7x
topology: tpu7x:2x2x1
jax: 0.10.0
libtpu: 0.0.40
codegen_flags: <defaults>
</compile_context>

<pallas_src>
import functools
import math

import jax
import jax.numpy as jnp
from jax import lax
from jax.experimental import pallas as pl
from jax.experimental.pallas import tpu as pltpu


def _roll_left_lanes(x, amt):
    """Static left-rotation of the last (lane) axis: two static slices + concat."""
    n = x.shape[-1]
    amt = amt % n
    if amt == 0:
        return x
    return jnp.concatenate([x[..., amt:], x[..., :amt]], axis=-1)


def _rel_mha_kernel(q_ref, k_ref, v_ref, mask_ref, pp_ref,
                    wq_ref, bq_ref, wk_ref, bk_ref, wv_ref, bv_ref,
                    bu_ref, bvr_ref, wo_ref, bo_ref,
                    out_ref, *, tq, tk):
    f32, bf16 = jnp.float32, jnp.bfloat16
    T1, D = q_ref.shape[1], q_ref.shape[2]
    T2 = k_ref.shape[1]
    Tm = mask_ref.shape[1]            # 1 or T1
    H, _, dk = bu_ref.shape

    q = q_ref[0]                      # (T1, D) bf16
    k = k_ref[0]                      # (T2, D) bf16
    v = v_ref[0]                      # (T2, D) bf16
    msk = mask_ref[0]                 # (Tm, T2) int32

    # ---- head-major projections directly from the MXU (no lane-split loops).
    # (H, T, D) x (H, D, dk), batched over heads, f32 accumulation.
    def project(x, w_ref, b_ref):
        xb = jnp.broadcast_to(x, (H,) + x.shape)           # (H, T, D) bf16
        y = jnp.einsum('htd,hdk->htk', xb, w_ref[...],
                       preferred_element_type=f32)
        return y + b_ref[...]                              # + (H, 1, dk)

    q_h = project(q, wq_ref, bq_ref)                       # scale folded in wq/bq
    k_h = project(k, wk_ref, bk_ref).astype(bf16)          # (H, T2, dk)
    v_h = project(v, wv_ref, bv_ref).astype(bf16)          # (H, T2, dk)
    q_u = (q_h + bu_ref[...]).astype(bf16)                 # content bias
    q_v = (q_h + bvr_ref[...]).astype(bf16)                # positional bias

    # ---- query tiles x key blocks with online softmax.
    for t0 in range(0, T1, tq):
        tq_i = min(tq, T1 - t0)
        qu = q_u[:, t0:t0 + tq_i, :]
        qv = q_v[:, t0:t0 + tq_i, :]
        msk_rows = msk if Tm == 1 else msk[t0:t0 + tq_i, :]

        m_i = jnp.full((H, tq_i, 1), -jnp.inf, f32)
        l_i = jnp.zeros((H, tq_i, 1), f32)
        acc = jnp.zeros((H, tq_i, dk), f32)

        # hoisted per-row left-shift amounts for the skew
        row = lax.broadcasted_iota(jnp.int32, (1, tq_i, 1), 1)
        lshift = (tq_i - 1) - row

        for s0 in range(0, T2, tk):
            tk_j = min(tk, T2 - s0)
            kb = k_h[:, s0:s0 + tk_j, :]
            vb = v_h[:, s0:s0 + tk_j, :]

            ac = jnp.einsum('htd,hsd->hts', qu, kb,
                            preferred_element_type=f32)     # (H, tq_i, tk_j)

            # rel-pos term: row w (global t0+w), col j (global s0+j) uses rel
            # index (T1-1) - (t0+w) + (s0+j) -> contiguous slab of p.
            start = T1 - t0 - tq_i + s0
            slab = tq_i + tk_j
            p_slab = pp_ref[:, start:start + slab, :]       # (H, slab, dk) bf16
            bd = jnp.einsum('htd,hcd->htc', qv, p_slab,
                            preferred_element_type=f32)     # (H, tq_i, slab)

            # skew: row w needs a left rotation by (tq_i-1-w); done in
            # O(log tq_i) full-width passes instead of tq_i per-row slices.
            nbits = (tq_i - 1).bit_length()
            for bit in range(nbits):
                rolled = _roll_left_lanes(bd, 1 << bit)
                take = ((lshift >> bit) & 1) == 1
                bd = jnp.where(take, rolled, bd)
            bd = bd[:, :, :tk_j]                            # (H, tq_i, tk_j)

            mb = (msk_rows[:, s0:s0 + tk_j] != 0)[None]     # (1,{1|tq_i},tk_j)
            # -1e30 instead of -inf: partially-masked rows match torch exactly;
            # fully-masked rows yield uniform attention instead of NaN.
            s_hts = jnp.where(mb, ac + bd, -1e30)

            m_new = jnp.maximum(m_i, jnp.max(s_hts, axis=-1, keepdims=True))
            alpha = jnp.exp(m_i - m_new)
            p_e = jnp.exp(s_hts - m_new)
            l_i = alpha * l_i + jnp.sum(p_e, axis=-1, keepdims=True)
            acc = alpha * acc + jnp.einsum('hts,hsd->htd', p_e.astype(bf16), vb,
                                           preferred_element_type=f32)
            m_i = m_new

        o_h = acc * pl.reciprocal(l_i, approx=True)         # (H, tq_i, dk) f32

        # merge heads without a lane concat: accumulate H (tq,dk)@(dk,D) matmuls.
        out_t = jnp.zeros((tq_i, D), f32)
        for h in range(H):
            out_t = out_t + jnp.dot(o_h[h].astype(bf16), wo_ref[h],
                                    preferred_element_type=f32)
        out_t = out_t + bo_ref[...]
        out_ref[0, t0:t0 + tq_i, :] = out_t.astype(out_ref.dtype)


def rel_pos_mha(q, k, v, p, mask, params, *, tq=256, tk=256):
    """q:(B,T1,D) k,v:(B,T2,D) p:(B,Lp,D) mask:(B,1,1|T1,T2) bool."""
    B, T1, D = q.shape
    T2 = k.shape[1]
    Lp = p.shape[1]
    assert Lp >= 2 * T2 - 1
    H, dk = params['b_u'].shape
    assert H * dk == D

    L = B * Lp                 # torch folds batch into the position axis
    C = T1 + T2 - 1            # relative positions actually consumed

    # torch's flatten/unfold must produce exactly T1 windows and no window may
    # cross a row of the flattened (T1, L) view; both hold whenever C <= L.
    Wn = (T1 * L - (T1 - 1) - T2) // (L - 1) + 1
    assert Wn == T1, "unfold window count must equal T1"
    assert C <= L, "unfold windows must not cross rows of the flattened view"

    tq = max(1, min(tq, T1))
    tk = max(1, min(tk, T2))

    f32, bf16 = jnp.float32, jnp.bfloat16
    scale = 1.0 / math.sqrt(dk)

    def heads_in_out(w):       # (D_in, D_out) -> (H, D_in, dk)
        return jnp.transpose(w.reshape(D, H, dk), (1, 0, 2))

    # Fold 1/sqrt(dk) into the q-side weights/biases (pre-matmul scaling is
    # equivalent to torch's post-matmul scaling of ac+bd).
    w_qh = heads_in_out(params['wq'] * scale).astype(bf16)
    w_kh = heads_in_out(params['wk']).astype(bf16)
    w_vh = heads_in_out(params['wv']).astype(bf16)
    b_qh = (params['bq'] * scale).reshape(H, 1, dk).astype(f32)
    b_kh = params['bk'].reshape(H, 1, dk).astype(f32)
    b_vh = params['bv'].reshape(H, 1, dk).astype(f32)
    b_uh = (params['b_u'] * scale).reshape(H, 1, dk).astype(f32)
    b_vrel = (params['b_v'] * scale).reshape(H, 1, dk).astype(f32)
    w_oh = params['wo'].reshape(H, dk, D).astype(bf16)      # (H, dk, D)
    b_o = params['bo'].reshape(1, D).astype(f32)

    # Batch-invariant position preprocessing (hoisted out of the grid loop):
    # project only the C rows the unfold can ever read, split heads, and pad
    # the relative axis so every in-kernel slab slice stays in range.
    p_used = p.reshape(L, D)[:C]
    pp = lax.dot_general(p_used.astype(bf16), params['wp'].astype(bf16),
                         (((1,), (0,)), ((), ())),
                         preferred_element_type=f32)          # (C, D)
    pp_h = jnp.transpose(pp.reshape(C, H, dk), (1, 0, 2))     # (H, C, dk)
    C_pad = ((C + 1 + 7) // 8) * 8
    pp_h = jnp.pad(pp_h, ((0, 0), (0, C_pad - C), (0, 0))).astype(bf16)

    mask3 = mask[:, 0].astype(jnp.int32)                      # (B, Tm, T2)
    Tm = mask3.shape[1]

    def inv(shape):            # grid-invariant (weights / biases / positions)
        n = len(shape)
        return pl.BlockSpec(shape, lambda b, _n=n: (0,) * _n)

    grid_spec = pltpu.PrefetchScalarGridSpec(
        num_scalar_prefetch=0,
        grid=(B,),
        in_specs=[
            pl.BlockSpec((1, T1, D), lambda b: (b, 0, 0)),    # q
            pl.BlockSpec((1, T2, D), lambda b: (b, 0, 0)),    # k
            pl.BlockSpec((1, T2, D), lambda b: (b, 0, 0)),    # v
            pl.BlockSpec((1, Tm, T2), lambda b: (b, 0, 0)),   # mask
            inv((H, C_pad, dk)),                              # projected positions
            inv((H, D, dk)), inv((H, 1, dk)),                 # w_q, b_q (scaled)
            inv((H, D, dk)), inv((H, 1, dk)),                 # w_k, b_k
            inv((H, D, dk)), inv((H, 1, dk)),                 # w_v, b_v
            inv((H, 1, dk)), inv((H, 1, dk)),                 # b_u, b_v (scaled)
            inv((H, dk, D)), inv((1, D)),                     # w_o, b_o
        ],
        out_specs=pl.BlockSpec((1, T1, D), lambda b: (b, 0, 0)),
    )

    # Working-set estimate -> vmem limit (clamped so it is valid on v5e/v6e/v7x).
    block_bytes = 2 * (T1 * D + 2 * T2 * D + Tm * T2) * 2
    block_bytes += 2 * (H * C_pad * dk + 4 * H * D * dk) * 2
    temp_bytes = 4 * H * tq * (tq + 3 * tk) * 4 + 6 * H * max(T1, T2) * dk * 4
    vmem_limit = int(min(64 * 2**20, max(32 * 2**20, 2 * (block_bytes + temp_bytes))))

    kernel = functools.partial(_rel_mha_kernel, tq=tq, tk=tk)
    return pl.pallas_call(
        kernel,
        out_shape=jax.ShapeDtypeStruct((B, T1, D), q.dtype),
        grid_spec=grid_spec,
        compiler_params=pltpu.CompilerParams(
            dimension_semantics=("parallel",),    # batches are independent
            vmem_limit_bytes=vmem_limit),
    )(q.astype(bf16), k.astype(bf16), v.astype(bf16), mask3, pp_h,
      w_qh, b_qh, w_kh, b_kh, w_vh, b_vh, b_uh, b_vrel, w_oh, b_o)


def reference(q, k, v, p, mask, params):
    """Pure-JAX transliteration of the PyTorch forward (eval mode) using the
    same numeric strategy (bf16 matmul operands, f32 accumulation) but the
    original full flatten/unfold relative shift and direct softmax."""
    B, T1, D = q.shape
    T2 = k.shape[1]
    H, dk = params['b_u'].shape
    f32, bf16 = jnp.float32, jnp.bfloat16

    def mm(a, b):
        return lax.dot_general(a.astype(bf16), b.astype(bf16),
                               (((a.ndim - 1,), (0,)), ((), ())),
                               preferred_element_type=f32)

    qp = mm(q, params['wq']) + params['bq']
    kp = mm(k, params['wk']) + params['bk']
    vp = mm(v, params['wv']) + params['bv']
    pp = mm(p.reshape(-1, D), params['wp'])                       # (L, D)

    qh = qp.reshape(B, T1, H, dk).transpose(0, 2, 1, 3)           # (B,H,T1,dk)
    kh = kp.reshape(B, T2, H, dk).transpose(0, 2, 1, 3)
    vh = vp.reshape(B, T2, H, dk).transpose(0, 2, 1, 3)
    ph = pp.reshape(-1, H, dk).transpose(1, 0, 2)                 # (H, L, dk)
    L = ph.shape[1]

    scale = 1.0 / math.sqrt(dk)
    q_u = (qh + params['b_u'][None, :, None, :]) * scale
    q_v = (qh + params['b_v'][None, :, None, :]) * scale

    ac = jnp.einsum('bhid,bhjd->bhij', q_u.astype(bf16), kh.astype(bf16),
                    preferred_element_type=f32)
    bd = jnp.einsum('bhid,hjd->bhij', q_v.astype(bf16), ph.astype(bf16),
                    preferred_element_type=f32)                   # (B,H,T1,L)

    flat = bd.reshape(B, H, T1 * L)[..., T1 - 1:]
    Wn = (flat.shape[-1] - T2) // (L - 1) + 1
    idx = jnp.arange(Wn)[:, None] * (L - 1) + jnp.arange(T2)[None, :]
    bd = flat[..., idx]                                           # (B,H,T1,T2)

    x = ac + bd
    x = jnp.where(mask, x, -jnp.inf)
    x = jax.nn.softmax(x, axis=-1)
    x = jnp.einsum('bhij,bhjd->bhid', x.astype(bf16), vh.astype(bf16),
                   preferred_element_type=f32)
    x = x.transpose(0, 2, 1, 3).reshape(B, T1, D)
    return mm(x, params['wo']) + params['bo']


if __name__ == "__main__":
    B, T1, T2, D, H = 2, 8, 8, 32, 4
    dk = D // H
    Lp = 2 * T2 - 1

    key = jax.random.PRNGKey(0)
    keys = jax.random.split(key, 16)

    def init(kk, shape, s):
        return jax.random.normal(kk, shape, jnp.float32) * s

    ws = 1.0 / math.sqrt(D)
    xav = math.sqrt(6.0 / (H + dk))
    # nn.Linear weights stored pre-transposed to (in, out) so y = x @ W + b.
    params = dict(
        wq=init(keys[0], (D, D), ws), bq=init(keys[1], (D,), 0.02),
        wk=init(keys[2], (D, D), ws), bk=init(keys[3], (D,), 0.02),
        wv=init(keys[4], (D, D), ws), bv=init(keys[5], (D,), 0.02),
        wp=init(keys[6], (D, D), ws),
        wo=init(keys[7], (D, D), ws), bo=init(keys[8], (D,), 0.02),
        b_u=init(keys[9], (H, dk), xav),
        b_v=init(keys[10], (H, dk), xav),
    )

    q = init(keys[11], (B, T1, D), 1.0)
    k = init(keys[12], (B, T2, D), 1.0)
    v = init(keys[13], (B, T2, D), 1.0)
    p = init(keys[14], (B, Lp, D), 1.0)
    lengths = jnp.array([T2, T2 - 2])
    mask = (jnp.arange(T2)[None, :] < lengths[:, None]).reshape(B, 1, 1, T2)

    ref = reference(q, k, v, p, mask, params)

    # single-tile path (tq/tk clamp to T1/T2)
    out = rel_pos_mha(q, k, v, p, mask, params)
    out = jax.block_until_ready(out)
    assert out.shape == (B, T1, D)
    err = float(jnp.max(jnp.abs(out - ref)))
    assert jnp.allclose(out, ref, atol=3e-2, rtol=3e-2), f"max abs err {err}"

    # tiled path: 2 query tiles x 2 key blocks exercises the online softmax,
    # the per-block p slabs and the log-step skew with wraparound offsets.
    out_t = rel_pos_mha(q, k, v, p, mask, params, tq=4, tk=4)
    out_t = jax.block_until_ready(out_t)
    err_t = float(jnp.max(jnp.abs(out_t - ref)))
    assert jnp.allclose(out_t, ref, atol=3e-2, rtol=3e-2), f"max abs err {err_t}"

    print("KERNEL_OK")
</pallas_src>

<mosaic_0001>
module attributes {stable_mosaic.version = 11 : i64} {
  func.func @_rel_mha_kernel(%arg0: i32, %arg1: memref<1x8x32xbf16, #tpu.memory_space<vmem>>, %arg2: memref<1x8x32xbf16, #tpu.memory_space<vmem>>, %arg3: memref<1x8x32xbf16, #tpu.memory_space<vmem>>, %arg4: memref<1x1x8xi32, #tpu.memory_space<vmem>>, %arg5: memref<4x16x8xbf16, #tpu.memory_space<vmem>>, %arg6: memref<4x32x8xbf16, #tpu.memory_space<vmem>>, %arg7: memref<4x1x8xf32, #tpu.memory_space<vmem>>, %arg8: memref<4x32x8xbf16, #tpu.memory_space<vmem>>, %arg9: memref<4x1x8xf32, #tpu.memory_space<vmem>>, %arg10: memref<4x32x8xbf16, #tpu.memory_space<vmem>>, %arg11: memref<4x1x8xf32, #tpu.memory_space<vmem>>, %arg12: memref<4x1x8xf32, #tpu.memory_space<vmem>>, %arg13: memref<4x1x8xf32, #tpu.memory_space<vmem>>, %arg14: memref<4x8x32xbf16, #tpu.memory_space<vmem>>, %arg15: memref<1x32xf32, #tpu.memory_space<vmem>>, %arg16: memref<1x8x32xf32, #tpu.memory_space<vmem>>) attributes {dimension_semantics = [#tpu.dimension_semantics<parallel>], iteration_bounds = array<i64: 2>, scalar_prefetch = 0 : i64, scratch_operands = 0 : i64, tpu.core_type = #tpu.core_type<tc>, window_params = [{transform_indices = @transform_0, window_bounds = array<i64: 1, 8, 32>}, {transform_indices = @transform_1, window_bounds = array<i64: 1, 8, 32>}, {transform_indices = @transform_2, window_bounds = array<i64: 1, 8, 32>}, {transform_indices = @transform_3, window_bounds = array<i64: 1, 1, 8>}, {pipeline_mode = #tpu.pipeline_mode<synchronous>, transform_indices = @transform_4, window_bounds = array<i64: 4, 16, 8>}, {pipeline_mode = #tpu.pipeline_mode<synchronous>, transform_indices = @transform_5, window_bounds = array<i64: 4, 32, 8>}, {pipeline_mode = #tpu.pipeline_mode<synchronous>, transform_indices = @transform_6, window_bounds = array<i64: 4, 1, 8>}, {pipeline_mode = #tpu.pipeline_mode<synchronous>, transform_indices = @transform_7, window_bounds = array<i64: 4, 32, 8>}, {pipeline_mode = #tpu.pipeline_mode<synchronous>, transform_indices = @transform_8, window_bounds = array<i64: 4, 1, 8>}, {pipeline_mode = #tpu.pipeline_mode<synchronous>, transform_indices = @transform_9, window_bounds = array<i64: 4, 32, 8>}, {pipeline_mode = #tpu.pipeline_mode<synchronous>, transform_indices = @transform_10, window_bounds = array<i64: 4, 1, 8>}, {pipeline_mode = #tpu.pipeline_mode<synchronous>, transform_indices = @transform_11, window_bounds = array<i64: 4, 1, 8>}, {pipeline_mode = #tpu.pipeline_mode<synchronous>, transform_indices = @transform_12, window_bounds = array<i64: 4, 1, 8>}, {pipeline_mode = #tpu.pipeline_mode<synchronous>, transform_indices = @transform_13, window_bounds = array<i64: 4, 8, 32>}, {pipeline_mode = #tpu.pipeline_mode<synchronous>, transform_indices = @transform_14, window_bounds = array<i64: 1, 32>}, {transform_indices = @transform_15, window_bounds = array<i64: 1, 8, 32>}]} {
    %c0 = arith.constant 0 : index
    %c0_0 = arith.constant 0 : index
    %c0_1 = arith.constant 0 : index
    %0 = vector.load %arg1[%c0, %c0_0, %c0_1] : memref<1x8x32xbf16, #tpu.memory_space<vmem>>, vector<1x8x32xbf16>
    %1 = vector.shape_cast %0 : vector<1x8x32xbf16> to vector<8x32xbf16>
    %c0_2 = arith.constant 0 : index
    %c0_3 = arith.constant 0 : index
    %c0_4 = arith.constant 0 : index
    %2 = vector.load %arg2[%c0_2, %c0_3, %c0_4] : memref<1x8x32xbf16, #tpu.memory_space<vmem>>, vector<1x8x32xbf16>
    %3 = vector.shape_cast %2 : vector<1x8x32xbf16> to vector<8x32xbf16>
    %c0_5 = arith.constant 0 : index
    %c0_6 = arith.constant 0 : index
    %c0_7 = arith.constant 0 : index
    %4 = vector.load %arg3[%c0_5, %c0_6, %c0_7] : memref<1x8x32xbf16, #tpu.memory_space<vmem>>, vector<1x8x32xbf16>
    %5 = vector.shape_cast %4 : vector<1x8x32xbf16> to vector<8x32xbf16>
    %c0_8 = arith.constant 0 : index
    %c0_9 = arith.constant 0 : index
    %c0_10 = arith.constant 0 : index
    %6 = vector.load %arg4[%c0_8, %c0_9, %c0_10] : memref<1x1x8xi32, #tpu.memory_space<vmem>>, vector<1x1x8xi32>
    %7 = vector.shape_cast %6 : vector<1x1x8xi32> to vector<1x8xi32>
    %8 = vector.shape_cast %1 : vector<8x32xbf16> to vector<1x8x32xbf16>
    %9 = vector.broadcast %8 : vector<1x8x32xbf16> to vector<4x8x32xbf16>
    %c0_11 = arith.constant 0 : index
    %c0_12 = arith.constant 0 : index
    %c0_13 = arith.constant 0 : index
    %10 = vector.load %arg6[%c0_11, %c0_12, %c0_13] : memref<4x32x8xbf16, #tpu.memory_space<vmem>>, vector<4x32x8xbf16>
    "tpu.trace_start"() <{level = 10 : i32, message = "htd,hdk->htk"}> : () -> ()
    %cst = arith.constant dense<0.000000e+00> : vector<4x8x8xf32>
    %11 = tpu.matmul %9, %10, %cst {dimension_numbers = #tpu.dot_dimension_numbers<[2], [1], [1], [2], [0, 0, 0, 1, 1, 2], [0], [0]>} : vector<4x8x32xbf16>, vector<4x32x8xbf16>, vector<4x8x8xf32> -> vector<4x8x8xf32>
    "tpu.trace_stop"() : () -> ()
    %c0_14 = arith.constant 0 : index
    %c0_15 = arith.constant 0 : index
    %c0_16 = arith.constant 0 : index
    %12 = vector.load %arg7[%c0_14, %c0_15, %c0_16] : memref<4x1x8xf32, #tpu.memory_space<vmem>>, vector<4x1x8xf32>
    %13 = vector.broadcast %12 : vector<4x1x8xf32> to vector<4x8x8xf32>
    %14 = arith.addf %11, %13 : vector<4x8x8xf32>
    %15 = vector.shape_cast %3 : vector<8x32xbf16> to vector<1x8x32xbf16>
    %16 = vector.broadcast %15 : vector<1x8x32xbf16> to vector<4x8x32xbf16>
    %c0_17 = arith.constant 0 : index
    %c0_18 = arith.constant 0 : index
    %c0_19 = arith.constant 0 : index
    %17 = vector.load %arg8[%c0_17, %c0_18, %c0_19] : memref<4x32x8xbf16, #tpu.memory_space<vmem>>, vector<4x32x8xbf16>
    "tpu.trace_start"() <{level = 10 : i32, message = "htd,hdk->htk"}> : () -> ()
    %cst_20 = arith.constant dense<0.000000e+00> : vector<4x8x8xf32>
    %18 = tpu.matmul %16, %17, %cst_20 {dimension_numbers = #tpu.dot_dimension_numbers<[2], [1], [1], [2], [0, 0, 0, 1, 1, 2], [0], [0]>} : vector<4x8x32xbf16>, vector<4x32x8xbf16>, vector<4x8x8xf32> -> vector<4x8x8xf32>
    "tpu.trace_stop"() : () -> ()
    %c0_21 = arith.constant 0 : index
    %c0_22 = arith.constant 0 : index
    %c0_23 = arith.constant 0 : index
    %19 = vector.load %arg9[%c0_21, %c0_22, %c0_23] : memref<4x1x8xf32, #tpu.memory_space<vmem>>, vector<4x1x8xf32>
    %20 = vector.broadcast %19 : vector<4x1x8xf32> to vector<4x8x8xf32>
    %21 = arith.addf %18, %20 : vector<4x8x8xf32>
    %22 = arith.truncf %21 : vector<4x8x8xf32> to vector<4x8x8xbf16>
    %23 = vector.shape_cast %5 : vector<8x32xbf16> to vector<1x8x32xbf16>
    %24 = vector.broadcast %23 : vector<1x8x32xbf16> to vector<4x8x32xbf16>
    %c0_24 = arith.constant 0 : index
    %c0_25 = arith.constant 0 : index
    %c0_26 = arith.constant 0 : index
    %25 = vector.load %arg10[%c0_24, %c0_25, %c0_26] : memref<4x32x8xbf16, #tpu.memory_space<vmem>>, vector<4x32x8xbf16>
    "tpu.trace_start"() <{level = 10 : i32, message = "htd,hdk->htk"}> : () -> ()
    %cst_27 = arith.constant dense<0.000000e+00> : vector<4x8x8xf32>
    %26 = tpu.matmul %24, %25, %cst_27 {dimension_numbers = #tpu.dot_dimension_numbers<[2], [1], [1], [2], [0, 0, 0, 1, 1, 2], [0], [0]>} : vector<4x8x32xbf16>, vector<4x32x8xbf16>, vector<4x8x8xf32> -> vector<4x8x8xf32>
    "tpu.trace_stop"() : () -> ()
    %c0_28 = arith.constant 0 : index
    %c0_29 = arith.constant 0 : index
    %c0_30 = arith.constant 0 : index
    %27 = vector.load %arg11[%c0_28, %c0_29, %c0_30] : memref<4x1x8xf32, #tpu.memory_space<vmem>>, vector<4x1x8xf32>
    %28 = vector.broadcast %27 : vector<4x1x8xf32> to vector<4x8x8xf32>
    %29 = arith.addf %26, %28 : vector<4x8x8xf32>
    %30 = arith.truncf %29 : vector<4x8x8xf32> to vector<4x8x8xbf16>
    %c0_31 = arith.constant 0 : index
    %c0_32 = arith.constant 0 : index
    %c0_33 = arith.constant 0 : index
    %31 = vector.load %arg12[%c0_31, %c0_32, %c0_33] : memref<4x1x8xf32, #tpu.memory_space<vmem>>, vector<4x1x8xf32>
    %32 = vector.broadcast %31 : vector<4x1x8xf32> to vector<4x8x8xf32>
    %33 = arith.addf %14, %32 : vector<4x8x8xf32>
    %34 = arith.truncf %33 : vector<4x8x8xf32> to vector<4x8x8xbf16>
    %c0_34 = arith.constant 0 : index
    %c0_35 = arith.constant 0 : index
    %c0_36 = arith.constant 0 : index
    %35 = vector.load %arg13[%c0_34, %c0_35, %c0_36] : memref<4x1x8xf32, #tpu.memory_space<vmem>>, vector<4x1x8xf32>
    %36 = vector.broadcast %35 : vector<4x1x8xf32> to vector<4x8x8xf32>
    %37 = arith.addf %14, %36 : vector<4x8x8xf32>
    %38 = arith.truncf %37 : vector<4x8x8xf32> to vector<4x8x8xbf16>
    %cst_37 = arith.constant 0xFF800000 : f32
    %39 = vector.broadcast %cst_37 : f32 to vector<4x8x1xf32>
    %cst_38 = arith.constant 0.000000e+00 : f32
    %40 = vector.broadcast %cst_38 : f32 to vector<4x8x1xf32>
    %cst_39 = arith.constant 0.000000e+00 : f32
    %41 = vector.broadcast %cst_39 : f32 to vector<4x8x8xf32>
    %42 = tpu.iota {dimensions = array<i32: 1>} : vector<1x8x1xi32>
    %c7_i32 = arith.constant 7 : i32
    %43 = vector.broadcast %c7_i32 : i32 to vector<1x8x1xi32>
    %44 = arith.subi %43, %42 : vector<1x8x1xi32>
    "tpu.trace_start"() <{level = 10 : i32, message = "htd,hsd->hts"}> : () -> ()
    %cst_40 = arith.constant dense<0.000000e+00> : vector<4x8x8xf32>
    %45 = tpu.matmul %34, %22, %cst_40 {dimension_numbers = #tpu.dot_dimension_numbers<[2], [2], [1], [1], [0, 0, 0, 1, 1, 1], [0], [0]>} : vector<4x8x8xbf16>, vector<4x8x8xbf16>, vector<4x8x8xf32> -> vector<4x8x8xf32>
    "tpu.trace_stop"() : () -> ()
    %c0_41 = arith.constant 0 : index
    %c0_42 = arith.constant 0 : index
    %c0_43 = arith.constant 0 : index
    %46 = vector.load %arg5[%c0_41, %c0_42, %c0_43] : memref<4x16x8xbf16, #tpu.memory_space<vmem>>, vector<4x16x8xbf16>
    "tpu.trace_start"() <{level = 10 : i32, message = "htd,hcd->htc"}> : () -> ()
    %cst_44 = arith.constant dense<0.000000e+00> : vector<4x8x16xf32>
    %47 = tpu.matmul %38, %46, %cst_44 {dimension_numbers = #tpu.dot_dimension_numbers<[2], [2], [1], [1], [0, 0, 0, 1, 1, 1], [0], [0]>} : vector<4x8x8xbf16>, vector<4x16x8xbf16>, vector<4x8x16xf32> -> vector<4x8x16xf32>
    "tpu.trace_stop"() : () -> ()
    %48 = vector.extract_strided_slice %47 {offsets = [0, 0, 1], sizes = [4, 8, 15], strides = [1, 1, 1]} : vector<4x8x16xf32> to vector<4x8x15xf32>
    %49 = vector.extract_strided_slice %47 {offsets = [0, 0, 0], sizes = [4, 8, 1], strides = [1, 1, 1]} : vector<4x8x16xf32> to vector<4x8x1xf32>
    %50 = tpu.concatenate %48, %49 in 2 : vector<4x8x15xf32>, vector<4x8x1xf32> -> vector<4x8x16xf32>
    %c0_i32 = arith.constant 0 : i32
    %51 = vector.broadcast %c0_i32 : i32 to vector<1x8x1xi32>
    %52 = arith.shrsi %44, %51 : vector<1x8x1xi32>
    %c1_i32 = arith.constant 1 : i32
    %53 = vector.broadcast %c1_i32 : i32 to vector<1x8x1xi32>
    %54 = arith.andi %52, %53 : vector<1x8x1xi32>
    %c1_i32_45 = arith.constant 1 : i32
    %55 = vector.broadcast %c1_i32_45 : i32 to vector<1x8x1xi32>
    %56 = arith.cmpi eq, %54, %55 : vector<1x8x1xi32>
    %57 = vector.shape_cast %56 : vector<1x8x1xi1> to vector<1x8x1xi1>
    %58 = vector.broadcast %57 : vector<1x8x1xi1> to vector<4x8x16xi1>
    %59 = arith.select %58, %50, %47 : vector<4x8x16xi1>, vector<4x8x16xf32>
    %60 = vector.extract_strided_slice %59 {offsets = [0, 0, 2], sizes = [4, 8, 14], strides = [1, 1, 1]} : vector<4x8x16xf32> to vector<4x8x14xf32>
    %61 = vector.extract_strided_slice %59 {offsets = [0, 0, 0], sizes = [4, 8, 2], strides = [1, 1, 1]} : vector<4x8x16xf32> to vector<4x8x2xf32>
    %62 = tpu.concatenate %60, %61 in 2 : vector<4x8x14xf32>, vector<4x8x2xf32> -> vector<4x8x16xf32>
    %c1_i32_46 = arith.constant 1 : i32
    %63 = vector.broadcast %c1_i32_46 : i32 to vector<1x8x1xi32>
    %64 = arith.shrsi %44, %63 : vector<1x8x1xi32>
    %c1_i32_47 = arith.constant 1 : i32
    %65 = vector.broadcast %c1_i32_47 : i32 to vector<1x8x1xi32>
    %66 = arith.andi %64, %65 : vector<1x8x1xi32>
    %c1_i32_48 = arith.constant 1 : i32
    %67 = vector.broadcast %c1_i32_48 : i32 to vector<1x8x1xi32>
    %68 = arith.cmpi eq, %66, %67 : vector<1x8x1xi32>
    %69 = vector.shape_cast %68 : vector<1x8x1xi1> to vector<1x8x1xi1>
    %70 = vector.broadcast %69 : vector<1x8x1xi1> to vector<4x8x16xi1>
    %71 = arith.select %70, %62, %59 : vector<4x8x16xi1>, vector<4x8x16xf32>
    %72 = vector.extract_strided_slice %71 {offsets = [0, 0, 4], sizes = [4, 8, 12], strides = [1, 1, 1]} : vector<4x8x16xf32> to vector<4x8x12xf32>
    %73 = vector.extract_strided_slice %71 {offsets = [0, 0, 0], sizes = [4, 8, 4], strides = [1, 1, 1]} : vector<4x8x16xf32> to vector<4x8x4xf32>
    %74 = tpu.concatenate %72, %73 in 2 : vector<4x8x12xf32>, vector<4x8x4xf32> -> vector<4x8x16xf32>
    %c2_i32 = arith.constant 2 : i32
    %75 = vector.broadcast %c2_i32 : i32 to vector<1x8x1xi32>
    %76 = arith.shrsi %44, %75 : vector<1x8x1xi32>
    %c1_i32_49 = arith.constant 1 : i32
    %77 = vector.broadcast %c1_i32_49 : i32 to vector<1x8x1xi32>
    %78 = arith.andi %76, %77 : vector<1x8x1xi32>
    %c1_i32_50 = arith.constant 1 : i32
    %79 = vector.broadcast %c1_i32_50 : i32 to vector<1x8x1xi32>
    %80 = arith.cmpi eq, %78, %79 : vector<1x8x1xi32>
    %81 = vector.shape_cast %80 : vector<1x8x1xi1> to vector<1x8x1xi1>
    %82 = vector.broadcast %81 : vector<1x8x1xi1> to vector<4x8x16xi1>
    %83 = arith.select %82, %74, %71 : vector<4x8x16xi1>, vector<4x8x16xf32>
    %84 = vector.extract_strided_slice %83 {offsets = [0, 0, 0], sizes = [4, 8, 8], strides = [1, 1, 1]} : vector<4x8x16xf32> to vector<4x8x8xf32>
    %c0_i32_51 = arith.constant 0 : i32
    %85 = vector.broadcast %c0_i32_51 : i32 to vector<1x8xi32>
    %86 = arith.cmpi ne, %7, %85 : vector<1x8xi32>
    %87 = vector.shape_cast %86 : vector<1x8xi1> to vector<1x1x8xi1>
    %88 = arith.addf %45, %84 : vector<4x8x8xf32>
    %cst_52 = arith.constant -1.000000e+30 : f32
    %89 = vector.shape_cast %87 : vector<1x1x8xi1> to vector<1x1x8xi1>
    %90 = vector.broadcast %89 : vector<1x1x8xi1> to vector<4x8x8xi1>
    %91 = vector.broadcast %cst_52 : f32 to vector<4x8x8xf32>
    %92 = arith.select %90, %88, %91 : vector<4x8x8xi1>, vector<4x8x8xf32>
    %cst_53 = arith.constant dense<0xFF800000> : vector<4x8xf32>
    %93 = vector.multi_reduction <maximumf>, %92, %cst_53 [2] : vector<4x8x8xf32> to vector<4x8xf32>
    %94 = vector.shape_cast %93 : vector<4x8xf32> to vector<4x8x1xf32>
    %95 = arith.maximumf %39, %94 : vector<4x8x1xf32>
    %96 = arith.subf %39, %95 : vector<4x8x1xf32>
    %97 = math.exp %96 : vector<4x8x1xf32>
    %98 = vector.broadcast %95 : vector<4x8x1xf32> to vector<4x8x8xf32>
    %99 = arith.subf %92, %98 : vector<4x8x8xf32>
    %100 = math.exp %99 : vector<4x8x8xf32>
    %101 = arith.mulf %97, %40 : vector<4x8x1xf32>
    %cst_54 = arith.constant dense<0.000000e+00> : vector<4x8xf32>
    %102 = vector.multi_reduction <add>, %100, %cst_54 [2] : vector<4x8x8xf32> to vector<4x8xf32>
    %103 = vector.shape_cast %102 : vector<4x8xf32> to vector<4x8x1xf32>
    %104 = arith.addf %101, %103 : vector<4x8x1xf32>
    %105 = vector.broadcast %97 : vector<4x8x1xf32> to vector<4x8x8xf32>
    %106 = arith.mulf %105, %41 : vector<4x8x8xf32>
    %107 = arith.truncf %100 : vector<4x8x8xf32> to vector<4x8x8xbf16>
    "tpu.trace_start"() <{level = 10 : i32, message = "hts,hsd->htd"}> : () -> ()
    %cst_55 = arith.constant dense<0.000000e+00> : vector<4x8x8xf32>
    %108 = tpu.matmul %107, %30, %cst_55 {dimension_numbers = #tpu.dot_dimension_numbers<[2], [1], [1], [2], [0, 0, 0, 1, 1, 2], [0], [0]>} : vector<4x8x8xbf16>, vector<4x8x8xbf16>, vector<4x8x8xf32> -> vector<4x8x8xf32>
    "tpu.trace_stop"() : () -> ()
    %109 = arith.addf %106, %108 : vector<4x8x8xf32>
    %110 = tpu.reciprocal %104 {approx = true} : vector<4x8x1xf32> -> vector<4x8x1xf32>
    %111 = vector.broadcast %110 : vector<4x8x1xf32> to vector<4x8x8xf32>
    %112 = arith.mulf %109, %111 : vector<4x8x8xf32>
    %cst_56 = arith.constant 0.000000e+00 : f32
    %113 = vector.broadcast %cst_56 : f32 to vector<8x32xf32>
    %114 = vector.extract_strided_slice %112 {offsets = [0, 0, 0], sizes = [1, 8, 8], strides = [1, 1, 1]} : vector<4x8x8xf32> to vector<1x8x8xf32>
    %115 = vector.shape_cast %114 : vector<1x8x8xf32> to vector<8x8xf32>
    %116 = arith.truncf %115 : vector<8x8xf32> to vector<8x8xbf16>
    %c0_57 = arith.constant 0 : index
    %c0_58 = arith.constant 0 : index
    %c0_59 = arith.constant 0 : index
    %117 = vector.load %arg14[%c0_57, %c0_58, %c0_59] : memref<4x8x32xbf16, #tpu.memory_space<vmem>>, vector<1x8x32xbf16>
    %118 = vector.shape_cast %117 : vector<1x8x32xbf16> to vector<8x32xbf16>
    %cst_60 = arith.constant dense<0.000000e+00> : vector<8x32xf32>
    %119 = tpu.matmul %116, %118, %cst_60 {dimension_numbers = #tpu.dot_dimension_numbers<[1], [0], [0], [1], [0, 0, 1, 1], [], []>} : vector<8x8xbf16>, vector<8x32xbf16>, vector<8x32xf32> -> vector<8x32xf32>
    %120 = arith.addf %113, %119 : vector<8x32xf32>
    %121 = vector.extract_strided_slice %112 {offsets = [1, 0, 0], sizes = [1, 8, 8], strides = [1, 1, 1]} : vector<4x8x8xf32> to vector<1x8x8xf32>
    %122 = vector.shape_cast %121 : vector<1x8x8xf32> to vector<8x8xf32>
    %123 = arith.truncf %122 : vector<8x8xf32> to vector<8x8xbf16>
    %c1 = arith.constant 1 : index
    %c0_61 = arith.constant 0 : index
    %c0_62 = arith.constant 0 : index
    %124 = vector.load %arg14[%c1, %c0_61, %c0_62] : memref<4x8x32xbf16, #tpu.memory_space<vmem>>, vector<1x8x32xbf16>
    %125 = vector.shape_cast %124 : vector<1x8x32xbf16> to vector<8x32xbf16>
    %cst_63 = arith.constant dense<0.000000e+00> : vector<8x32xf32>
    %126 = tpu.matmul %123, %125, %cst_63 {dimension_numbers = #tpu.dot_dimension_numbers<[1], [0], [0], [1], [0, 0, 1, 1], [], []>} : vector<8x8xbf16>, vector<8x32xbf16>, vector<8x32xf32> -> vector<8x32xf32>
    %127 = arith.addf %120, %126 : vector<8x32xf32>
    %128 = vector.extract_strided_slice %112 {offsets = [2, 0, 0], sizes = [1, 8, 8], strides = [1, 1, 1]} : vector<4x8x8xf32> to vector<1x8x8xf32>
    %129 = vector.shape_cast %128 : vector<1x8x8xf32> to vector<8x8xf32>
    %130 = arith.truncf %129 : vector<8x8xf32> to vector<8x8xbf16>
    %c2 = arith.constant 2 : index
    %c0_64 = arith.constant 0 : index
    %c0_65 = arith.constant 0 : index
    %131 = vector.load %arg14[%c2, %c0_64, %c0_65] : memref<4x8x32xbf16, #tpu.memory_space<vmem>>, vector<1x8x32xbf16>
    %132 = vector.shape_cast %131 : vector<1x8x32xbf16> to vector<8x32xbf16>
    %cst_66 = arith.constant dense<0.000000e+00> : vector<8x32xf32>
    %133 = tpu.matmul %130, %132, %cst_66 {dimension_numbers = #tpu.dot_dimension_numbers<[1], [0], [0], [1], [0, 0, 1, 1], [], []>} : vector<8x8xbf16>, vector<8x32xbf16>, vector<8x32xf32> -> vector<8x32xf32>
    %134 = arith.addf %127, %133 : vector<8x32xf32>
    %135 = vector.extract_strided_slice %112 {offsets = [3, 0, 0], sizes = [1, 8, 8], strides = [1, 1, 1]} : vector<4x8x8xf32> to vector<1x8x8xf32>
    %136 = vector.shape_cast %135 : vector<1x8x8xf32> to vector<8x8xf32>
    %137 = arith.truncf %136 : vector<8x8xf32> to vector<8x8xbf16>
    %c3 = arith.constant 3 : index
    %c0_67 = arith.constant 0 : index
    %c0_68 = arith.constant 0 : index
    %138 = vector.load %arg14[%c3, %c0_67, %c0_68] : memref<4x8x32xbf16, #tpu.memory_space<vmem>>, vector<1x8x32xbf16>
    %139 = vector.shape_cast %138 : vector<1x8x32xbf16> to vector<8x32xbf16>
    %cst_69 = arith.constant dense<0.000000e+00> : vector<8x32xf32>
    %140 = tpu.matmul %137, %139, %cst_69 {dimension_numbers = #tpu.dot_dimension_numbers<[1], [0], [0], [1], [0, 0, 1, 1], [], []>} : vector<8x8xbf16>, vector<8x32xbf16>, vector<8x32xf32> -> vector<8x32xf32>
    %141 = arith.addf %134, %140 : vector<8x32xf32>
    %c0_70 = arith.constant 0 : index
    %c0_71 = arith.constant 0 : index
    %142 = vector.load %arg15[%c0_70, %c0_71] : memref<1x32xf32, #tpu.memory_space<vmem>>, vector<1x32xf32>
    %143 = vector.broadcast %142 : vector<1x32xf32> to vector<8x32xf32>
    %144 = arith.addf %141, %143 : vector<8x32xf32>
    %c0_72 = arith.constant 0 : index
    %c0_73 = arith.constant 0 : index
    %c0_74 = arith.constant 0 : index
    %145 = vector.load %arg16[%c0_72, %c0_73, %c0_74] : memref<1x8x32xf32, #tpu.memory_space<vmem>>, vector<1x8x32xf32>
    %146 = vector.shape_cast %145 : vector<1x8x32xf32> to vector<8x32xf32>
    %147 = vector.shape_cast %144 : vector<8x32xf32> to vector<1x8x32xf32>
    tpu.vector_store %arg16[%c0_72, %c0_73, %c0_74], %147 {strides = array<i32>} : memref<1x8x32xf32, #tpu.memory_space<vmem>>, vector<1x8x32xf32>,
    return
  }
  func.func @transform_0(%arg0: i32) -> (i32, i32, i32) {
    %c0_i32 = arith.constant 0 : i32
    %c0_i32_0 = arith.constant 0 : i32
    %c0_i32_1 = arith.constant 0 : i32
    return %arg0, %c0_i32, %c0_i32_0 : i32, i32, i32
  }
  func.func @transform_1(%arg0: i32) -> (i32, i32, i32) {
    %c0_i32 = arith.constant 0 : i32
    %c0_i32_0 = arith.constant 0 : i32
    %c0_i32_1 = arith.constant 0 : i32
    return %arg0, %c0_i32, %c0_i32_0 : i32, i32, i32
  }
  func.func @transform_2(%arg0: i32) -> (i32, i32, i32) {
    %c0_i32 = arith.constant 0 : i32
    %c0_i32_0 = arith.constant 0 : i32
    %c0_i32_1 = arith.constant 0 : i32
    return %arg0, %c0_i32, %c0_i32_0 : i32, i32, i32
  }
  func.func @transform_3(%arg0: i32) -> (i32, i32, i32) {
    %c0_i32 = arith.constant 0 : i32
    %c0_i32_0 = arith.constant 0 : i32
    %c0_i32_1 = arith.constant 0 : i32
    return %arg0, %c0_i32, %c0_i32_0 : i32, i32, i32
  }
  func.func @transform_4(%arg0: i32) -> (i32, i32, i32) {
    %c0_i32 = arith.constant 0 : i32
    %c0_i32_0 = arith.constant 0 : i32
    %c0_i32_1 = arith.constant 0 : i32
    %c0_i32_2 = arith.constant 0 : i32
    return %c0_i32, %c0_i32_0, %c0_i32_1 : i32, i32, i32
  }
  func.func @transform_5(%arg0: i32) -> (i32, i32, i32) {
    %c0_i32 = arith.constant 0 : i32
    %c0_i32_0 = arith.constant 0 : i32
    %c0_i32_1 = arith.constant 0 : i32
    %c0_i32_2 = arith.constant 0 : i32
    return %c0_i32, %c0_i32_0, %c0_i32_1 : i32, i32, i32
  }
  func.func @transform_6(%arg0: i32) -> (i32, i32, i32) {
    %c0_i32 = arith.constant 0 : i32
    %c0_i32_0 = arith.constant 0 : i32
    %c0_i32_1 = arith.constant 0 : i32
    %c0_i32_2 = arith.constant 0 : i32
    return %c0_i32, %c0_i32_0, %c0_i32_1 : i32, i32, i32
  }
  func.func @transform_7(%arg0: i32) -> (i32, i32, i32) {
    %c0_i32 = arith.constant 0 : i32
    %c0_i32_0 = arith.constant 0 : i32
    %c0_i32_1 = arith.constant 0 : i32
    %c0_i32_2 = arith.constant 0 : i32
    return %c0_i32, %c0_i32_0, %c0_i32_1 : i32, i32, i32
  }
  func.func @transform_8(%arg0: i32) -> (i32, i32, i32) {
    %c0_i32 = arith.constant 0 : i32
    %c0_i32_0 = arith.constant 0 : i32
    %c0_i32_1 = arith.constant 0 : i32
    %c0_i32_2 = arith.constant 0 : i32
    return %c0_i32, %c0_i32_0, %c0_i32_1 : i32, i32, i32
  }
  func.func @transform_9(%arg0: i32) -> (i32, i32, i32) {
    %c0_i32 = arith.constant 0 : i32
    %c0_i32_0 = arith.constant 0 : i32
    %c0_i32_1 = arith.constant 0 : i32
    %c0_i32_2 = arith.constant 0 : i32
    return %c0_i32, %c0_i32_0, %c0_i32_1 : i32, i32, i32
  }
  func.func @transform_10(%arg0: i32) -> (i32, i32, i32) {
    %c0_i32 = arith.constant 0 : i32
    %c0_i32_0 = arith.constant 0 : i32
    %c0_i32_1 = arith.constant 0 : i32
    %c0_i32_2 = arith.constant 0 : i32
    return %c0_i32, %c0_i32_0, %c0_i32_1 : i32, i32, i32
  }
  func.func @transform_11(%arg0: i32) -> (i32, i32, i32) {
    %c0_i32 = arith.constant 0 : i32
    %c0_i32_0 = arith.constant 0 : i32
    %c0_i32_1 = arith.constant 0 : i32
    %c0_i32_2 = arith.constant 0 : i32
    return %c0_i32, %c0_i32_0, %c0_i32_1 : i32, i32, i32
  }
  func.func @transform_12(%arg0: i32) -> (i32, i32, i32) {
    %c0_i32 = arith.constant 0 : i32
    %c0_i32_0 = arith.constant 0 : i32
    %c0_i32_1 = arith.constant 0 : i32
    %c0_i32_2 = arith.constant 0 : i32
    return %c0_i32, %c0_i32_0, %c0_i32_1 : i32, i32, i32
  }
  func.func @transform_13(%arg0: i32) -> (i32, i32, i32) {
    %c0_i32 = arith.constant 0 : i32
    %c0_i32_0 = arith.constant 0 : i32
    %c0_i32_1 = arith.constant 0 : i32
    %c0_i32_2 = arith.constant 0 : i32
    return %c0_i32, %c0_i32_0, %c0_i32_1 : i32, i32, i32
  }
  func.func @transform_14(%arg0: i32) -> (i32, i32) {
    %c0_i32 = arith.constant 0 : i32
    %c0_i32_0 = arith.constant 0 : i32
    %c0_i32_1 = arith.constant 0 : i32
    return %c0_i32, %c0_i32_0 : i32, i32
  }
  func.func @transform_15(%arg0: i32) -> (i32, i32, i32) {
    %c0_i32 = arith.constant 0 : i32
    %c0_i32_0 = arith.constant 0 : i32
    %c0_i32_1 = arith.constant 0 : i32
    return %arg0, %c0_i32, %c0_i32_0 : i32, i32, i32
  }
}

</mosaic_0001>

<llo_original>
// kernel: tpu_custom_call.1
$region0: #{tpu_custom_call.1}
  #allocation0 [shape = 'u32[]', space=smem, size = 0x4, offset = 0x4, fixed_abs, tag = 'smem constant byte address 0x4 - core index']
  #allocation1 [shape = 'u32[144,128]{1,0:T(1,128)}', space=vmem, size = 0x12000, scoped, tag = 'internal scratch']
  %s0 = inlined_call_operand.vmem [shape: bf16[2,8,32], index: 0, kind: input, shape index: {}]
  %s1 = inlined_call_operand.vmem [shape: bf16[2,8,32], index: 1, kind: input, shape index: {}]
  %s2 = inlined_call_operand.vmem [shape: bf16[2,8,32], index: 2, kind: input, shape index: {}]
  %s3 = inlined_call_operand.vmem [shape: s32[2,1,8], index: 3, kind: input, shape index: {}]
  %s4 = inlined_call_operand.vmem [shape: bf16[4,16,8], index: 4, kind: input, shape index: {}]
  %s5 = inlined_call_operand.vmem [shape: bf16[4,32,8], index: 5, kind: input, shape index: {}]
  %s6 = inlined_call_operand.vmem [shape: f32[4,1,8], index: 6, kind: input, shape index: {}]
  %s7 = inlined_call_operand.vmem [shape: bf16[4,32,8], index: 7, kind: input, shape index: {}]
  %s8 = inlined_call_operand.vmem [shape: f32[4,1,8], index: 8, kind: input, shape index: {}]
  %s9 = inlined_call_operand.vmem [shape: bf16[4,32,8], index: 9, kind: input, shape index: {}]
  %s10 = inlined_call_operand.vmem [shape: f32[4,1,8], index: 10, kind: input, shape index: {}]
  %s11 = inlined_call_operand.vmem [shape: f32[4,1,8], index: 11, kind: input, shape index: {}]
  %s12 = inlined_call_operand.vmem [shape: f32[4,1,8], index: 12, kind: input, shape index: {}]
  %s13 = inlined_call_operand.vmem [shape: bf16[4,8,32], index: 13, kind: input, shape index: {}]
  %s14 = inlined_call_operand.vmem [shape: f32[1,32], index: 14, kind: input, shape index: {}]
  %s15 = inlined_call_operand.hbm [shape: f32[2,8,32], index: 15, kind: output, shape index: {}]
  %s16 = sld [smem:[#allocation0]]
  $region93: #{tpu_custom_call.1} parent=0
    _
  %s18 = ssub.s32 1, %s16
  %s19 = scalar_select 0, %s18, %s16
  $region1: #{tpu_custom_call.1} parent=0
    #allocation2 [shape = 'u8[8192]{0}', space=vmem, size = 0x2000, scoped, tag = 'output window, operand 0']
    #allocation3 [shape = 's32[2]{0}', space=sflag, size = 0x8, scoped, tag = 'scoped memory for tpu_custom_call.1']
    %20 = vsyncpa [#allocation3], 0
    %s21 = scalar_lea.sflag [#allocation3], 1
    %22 = vsyncpa %s21, 0
    loop: start=0, step=1, limit=4
    $region2: #{tpu_custom_call.1} parent=1 // loop_pre_header
      _
    $region3: #{tpu_custom_call.1} parent=1 // loop_header
      %s24 = sphi 0, %s28
      %p25 = scmp.ge.s32.totalorder %s24, 4
      %s34 = sphi 0, %s36
      %s37 = sphi 0, %s34
      %s38 = sphi 0, %s37
      %s54 = sphi 0, %s38
      %s60 = sphi 0, %s62
      %s63 = sphi 0, %s60
      %s64 = sphi 0, %s63
      %s80 = sphi 0, %s64
      %s86 = sphi 0, %s88
      %s89 = sphi 0, %s86
      %s90 = sphi 0, %s89
      %s106 = sphi 0, %s90
      %s112 = sphi 0, %s114
      %s115 = sphi 0, %s112
      %s116 = sphi 0, %s115
      %s132 = sphi 0, %s116
      %s136 = sphi 0, %s136
      %s138 = sphi 0, %s136
      %s139 = sphi 0, %s138
      %s153 = sphi 0, %s139
      %s157 = sphi 0, %s157
      %s159 = sphi 0, %s157
      %s160 = sphi 0, %s159
      %s174 = sphi 0, %s160
      %s178 = sphi 0, %s178
      %s180 = sphi 0, %s178
      %s181 = sphi 0, %s180
      %s195 = sphi 0, %s181
      %s199 = sphi 0, %s199
      %s201 = sphi 0, %s199
      %s202 = sphi 0, %s201
      %s216 = sphi 0, %s202
      %s220 = sphi 0, %s220
      %s222 = sphi 0, %s220
      %s223 = sphi 0, %s222
      %s237 = sphi 0, %s223
      %s241 = sphi 0, %s241
      %s243 = sphi 0, %s241
      %s244 = sphi 0, %s243
      %s258 = sphi 0, %s244
      %s262 = sphi 0, %s262
      %s264 = sphi 0, %s262
      %s265 = sphi 0, %s264
      %s279 = sphi 0, %s265
      %s283 = sphi 0, %s283
      %s285 = sphi 0, %s283
      %s286 = sphi 0, %s285
      %s300 = sphi 0, %s286
      %s304 = sphi 0, %s304
      %s306 = sphi 0, %s304
      %s307 = sphi 0, %s306
      %s321 = sphi 0, %s307
      %s325 = sphi 0, %s325
      %s327 = sphi 0, %s325
      %s328 = sphi 0, %s327
      %s342 = sphi 0, %s328
      %s346 = sphi 0, %s346
      %s348 = sphi 0, %s346
      %s349 = sphi 0, %s348
      %s363 = sphi 0, %s349
      %s369 = sphi 0, %s371
      %s372 = sphi 0, %s369
      %s373 = sphi 0, %s372
      %s389 = sphi 0, %s373
    $region4: #{tpu_custom_call.1} parent=1 // loop_header_branch
      %27 = sbr.rel (%p25) target = $region8
    $region5: #{tpu_custom_call.1} parent=1 // loop_body
      %s29 = ssub.s32 %s24, 1
      %s30 = ssub.s32 %s24, 2
      %s31 = sadd.s32 %s24, 1
      %s32 = ssub.s32 %s24, %s31
      %p33 = scmp.eq.s32.totalorder %s32, 0
      %s35 = sadd.s32 %s34, 1
      %s36 = scalar_select %p33, %s34, %s35
      %p39 = pneg %p33
      %p40 = scmp.eq.s32.totalorder %s24, 1
      %p41 = por %p39, %p40
      %p42 = scmp.ne.s32.totalorder %s34, %s37
      %p43 = scmp.eq.s32.totalorder %s24, 0
      %p44 = por %p42, %p43
      %p45 = scmp.ne.s32.totalorder %s34, %s37
      %p46 = scmp.eq.s32.totalorder %s29, 1
      %p47 = por %p45, %p46
      %p48 = scmp.ne.s32.totalorder %s37, %s38
      %p49 = scmp.eq.s32.totalorder %s29, 0
      %p50 = por %p48, %p49
      %p51 = scmp.ne.s32.totalorder %s37, %s38
      %p52 = scmp.eq.s32.totalorder %s30, 1
      %p53 = por %p51, %p52
      %p55 = scmp.ne.s32.totalorder %s38, %s54
      %p56 = scmp.eq.s32.totalorder %s30, 0
      %p57 = por %p55, %p56
      %s58 = ssub.s32 %s24, %s31
      %p59 = scmp.eq.s32.totalorder %s58, 0
      %s61 = sadd.s32 %s60, 1
      %s62 = scalar_select %p59, %s60, %s61
      %p65 = pneg %p59
      %p66 = scmp.eq.s32.totalorder %s24, 1
      %p67 = por %p65, %p66
      %p68 = scmp.ne.s32.totalorder %s60, %s63
      %p69 = scmp.eq.s32.totalorder %s24, 0
      %p70 = por %p68, %p69
      %p71 = scmp.ne.s32.totalorder %s60, %s63
      %p72 = scmp.eq.s32.totalorder %s29, 1
      %p73 = por %p71, %p72
      %p74 = scmp.ne.s32.totalorder %s63, %s64
      %p75 = scmp.eq.s32.totalorder %s29, 0
      %p76 = por %p74, %p75
      %p77 = scmp.ne.s32.totalorder %s63, %s64
      %p78 = scmp.eq.s32.totalorder %s30, 1
      %p79 = por %p77, %p78
      %p81 = scmp.ne.s32.totalorder %s64, %s80
      %p82 = scmp.eq.s32.totalorder %s30, 0
      %p83 = por %p81, %p82
      %s84 = ssub.s32 %s24, %s31
      %p85 = scmp.eq.s32.totalorder %s84, 0
      %s87 = sadd.s32 %s86, 1
      %s88 = scalar_select %p85, %s86, %s87
      %p91 = pneg %p85
      %p92 = scmp.eq.s32.totalorder %s24, 1
      %p93 = por %p91, %p92
      %p94 = scmp.ne.s32.totalorder %s86, %s89
      %p95 = scmp.eq.s32.totalorder %s24, 0
      %p96 = por %p94, %p95
      %p97 = scmp.ne.s32.totalorder %s86, %s89
      %p98 = scmp.eq.s32.totalorder %s29, 1
      %p99 = por %p97, %p98
      %p100 = scmp.ne.s32.totalorder %s89, %s90
      %p101 = scmp.eq.s32.totalorder %s29, 0
      %p102 = por %p100, %p101
      %p103 = scmp.ne.s32.totalorder %s89, %s90
      %p104 = scmp.eq.s32.totalorder %s30, 1
      %p105 = por %p103, %p104
      %p107 = scmp.ne.s32.totalorder %s90, %s106
      %p108 = scmp.eq.s32.totalorder %s30, 0
      %p109 = por %p107, %p108
      %s110 = ssub.s32 %s24, %s31
      %p111 = scmp.eq.s32.totalorder %s110, 0
      %s113 = sadd.s32 %s112, 1
      %s114 = scalar_select %p111, %s112, %s113
      %p117 = pneg %p111
      %p118 = scmp.eq.s32.totalorder %s24, 1
      %p119 = por %p117, %p118
      %p120 = scmp.ne.s32.totalorder %s112, %s115
      %p121 = scmp.eq.s32.totalorder %s24, 0
      %p122 = por %p120, %p121
      %p123 = scmp.ne.s32.totalorder %s112, %s115
      %p124 = scmp.eq.s32.totalorder %s29, 1
      %p125 = por %p123, %p124
      %p126 = scmp.ne.s32.totalorder %s115, %s116
      %p127 = scmp.eq.s32.totalorder %s29, 0
      %p128 = por %p126, %p127
      %p129 = scmp.ne.s32.totalorder %s115, %s116
      %p130 = scmp.eq.s32.totalorder %s30, 1
      %p131 = por %p129, %p130
      %p133 = scmp.ne.s32.totalorder %s116, %s132
      %p134 = scmp.eq.s32.totalorder %s30, 0
      %p135 = por %p133, %p134
      %s137 = sadd.s32 %s136, 1
      %p140 = scmp.eq.s32.totalorder %s24, 1
      %p141 = scmp.ne.s32.totalorder %s136, %s138
      %p142 = scmp.eq.s32.totalorder %s24, 0
      %p143 = por %p141, %p142
      %p144 = scmp.ne.s32.totalorder %s136, %s138
      %p145 = scmp.eq.s32.totalorder %s29, 1
      %p146 = por %p144, %p145
      %p147 = scmp.ne.s32.totalorder %s138, %s139
      %p148 = scmp.eq.s32.totalorder %s29, 0
      %p149 = por %p147, %p148
      %p150 = scmp.ne.s32.totalorder %s138, %s139
      %p151 = scmp.eq.s32.totalorder %s30, 1
      %p152 = por %p150, %p151
      %p154 = scmp.ne.s32.totalorder %s139, %s153
      %p155 = scmp.eq.s32.totalorder %s30, 0
      %p156 = por %p154, %p155
      %s158 = sadd.s32 %s157, 1
      %p161 = scmp.eq.s32.totalorder %s24, 1
      %p162 = scmp.ne.s32.totalorder %s157, %s159
      %p163 = scmp.eq.s32.totalorder %s24, 0
      %p164 = por %p162, %p163
      %p165 = scmp.ne.s32.totalorder %s157, %s159
      %p166 = scmp.eq.s32.totalorder %s29, 1
      %p167 = por %p165, %p166
      %p168 = scmp.ne.s32.totalorder %s159, %s160
      %p169 = scmp.eq.s32.totalorder %s29, 0
      %p170 = por %p168, %p169
      %p171 = scmp.ne.s32.totalorder %s159, %s160
      %p172 = scmp.eq.s32.totalorder %s30, 1
      %p173 = por %p171, %p172
      %p175 = scmp.ne.s32.totalorder %s160, %s174
      %p176 = scmp.eq.s32.totalorder %s30, 0
      %p177 = por %p175, %p176
      %s179 = sadd.s32 %s178, 1
      %p182 = scmp.eq.s32.totalorder %s24, 1
      %p183 = scmp.ne.s32.totalorder %s178, %s180
      %p184 = scmp.eq.s32.totalorder %s24, 0
      %p185 = por %p183, %p184
      %p186 = scmp.ne.s32.totalorder %s178, %s180
      %p187 = scmp.eq.s32.totalorder %s29, 1
      %p188 = por %p186, %p187
      %p189 = scmp.ne.s32.totalorder %s180, %s181
      %p190 = scmp.eq.s32.totalorder %s29, 0
      %p191 = por %p189, %p190
      %p192 = scmp.ne.s32.totalorder %s180, %s181
      %p193 = scmp.eq.s32.totalorder %s30, 1
      %p194 = por %p192, %p193
      %p196 = scmp.ne.s32.totalorder %s181, %s195
      %p197 = scmp.eq.s32.totalorder %s30, 0
      %p198 = por %p196, %p197
      %s200 = sadd.s32 %s199, 1
      %p203 = scmp.eq.s32.totalorder %s24, 1
      %p204 = scmp.ne.s32.totalorder %s199, %s201
      %p205 = scmp.eq.s32.totalorder %s24, 0
      %p206 = por %p204, %p205
      %p207 = scmp.ne.s32.totalorder %s199, %s201
      %p208 = scmp.eq.s32.totalorder %s29, 1
      %p209 = por %p207, %p208
      %p210 = scmp.ne.s32.totalorder %s201, %s202
      %p211 = scmp.eq.s32.totalorder %s29, 0
      %p212 = por %p210, %p211
      %p213 = scmp.ne.s32.totalorder %s201, %s202
      %p214 = scmp.eq.s32.totalorder %s30, 1
      %p215 = por %p213, %p214
      %p217 = scmp.ne.s32.totalorder %s202, %s216
      %p218 = scmp.eq.s32.totalorder %s30, 0
      %p219 = por %p217, %p218
      %s221 = sadd.s32 %s220, 1
      %p224 = scmp.eq.s32.totalorder %s24, 1
      %p225 = scmp.ne.s32.totalorder %s220, %s222
      %p226 = scmp.eq.s32.totalorder %s24, 0
      %p227 = por %p225, %p226
      %p228 = scmp.ne.s32.totalorder %s220, %s222
      %p229 = scmp.eq.s32.totalorder %s29, 1
      %p230 = por %p228, %p229
      %p231 = scmp.ne.s32.totalorder %s222, %s223
      %p232 = scmp.eq.s32.totalorder %s29, 0
      %p233 = por %p231, %p232
      %p234 = scmp.ne.s32.totalorder %s222, %s223
      %p235 = scmp.eq.s32.totalorder %s30, 1
      %p236 = por %p234, %p235
      %p238 = scmp.ne.s32.totalorder %s223, %s237
      %p239 = scmp.eq.s32.totalorder %s30, 0
      %p240 = por %p238, %p239
      %s242 = sadd.s32 %s241, 1
      %p245 = scmp.eq.s32.totalorder %s24, 1
      %p246 = scmp.ne.s32.totalorder %s241, %s243
      %p247 = scmp.eq.s32.totalorder %s24, 0
      %p248 = por %p246, %p247
      %p249 = scmp.ne.s32.totalorder %s241, %s243
      %p250 = scmp.eq.s32.totalorder %s29, 1
      %p251 = por %p249, %p250
      %p252 = scmp.ne.s32.totalorder %s243, %s244
      %p253 = scmp.eq.s32.totalorder %s29, 0
      %p254 = por %p252, %p253
      %p255 = scmp.ne.s32.totalorder %s243, %s244
      %p256 = scmp.eq.s32.totalorder %s30, 1
      %p257 = por %p255, %p256
      %p259 = scmp.ne.s32.totalorder %s244, %s258
      %p260 = scmp.eq.s32.totalorder %s30, 0
      %p261 = por %p259, %p260
      %s263 = sadd.s32 %s262, 1
      %p266 = scmp.eq.s32.totalorder %s24, 1
      %p267 = scmp.ne.s32.totalorder %s262, %s264
      %p268 = scmp.eq.s32.totalorder %s24, 0
      %p269 = por %p267, %p268
      %p270 = scmp.ne.s32.totalorder %s262, %s264
      %p271 = scmp.eq.s32.totalorder %s29, 1
      %p272 = por %p270, %p271
      %p273 = scmp.ne.s32.totalorder %s264, %s265
      %p274 = scmp.eq.s32.totalorder %s29, 0
      %p275 = por %p273, %p274
      %p276 = scmp.ne.s32.totalorder %s264, %s265
      %p277 = scmp.eq.s32.totalorder %s30, 1
      %p278 = por %p276, %p277
      %p280 = scmp.ne.s32.totalorder %s265, %s279
      %p281 = scmp.eq.s32.totalorder %s30, 0
      %p282 = por %p280, %p281
      %s284 = sadd.s32 %s283, 1
      %p287 = scmp.eq.s32.totalorder %s24, 1
      %p288 = scmp.ne.s32.totalorder %s283, %s285
      %p289 = scmp.eq.s32.totalorder %s24, 0
      %p290 = por %p288, %p289
      %p291 = scmp.ne.s32.totalorder %s283, %s285
      %p292 = scmp.eq.s32.totalorder %s29, 1
      %p293 = por %p291, %p292
      %p294 = scmp.ne.s32.totalorder %s285, %s286
      %p295 = scmp.eq.s32.totalorder %s29, 0
      %p296 = por %p294, %p295
      %p297 = scmp.ne.s32.totalorder %s285, %s286
      %p298 = scmp.eq.s32.totalorder %s30, 1
      %p299 = por %p297, %p298
      %p301 = scmp.ne.s32.totalorder %s286, %s300
      %p302 = scmp.eq.s32.totalorder %s30, 0
      %p303 = por %p301, %p302
      %s305 = sadd.s32 %s304, 1
      %p308 = scmp.eq.s32.totalorder %s24, 1
      %p309 = scmp.ne.s32.totalorder %s304, %s306
      %p310 = scmp.eq.s32.totalorder %s24, 0
      %p311 = por %p309, %p310
      %p312 = scmp.ne.s32.totalorder %s304, %s306
      %p313 = scmp.eq.s32.totalorder %s29, 1
      %p314 = por %p312, %p313
      %p315 = scmp.ne.s32.totalorder %s306, %s307
      %p316 = scmp.eq.s32.totalorder %s29, 0
      %p317 = por %p315, %p316
      %p318 = scmp.ne.s32.totalorder %s306, %s307
      %p319 = scmp.eq.s32.totalorder %s30, 1
      %p320 = por %p318, %p319
      %p322 = scmp.ne.s32.totalorder %s307, %s321
      %p323 = scmp.eq.s32.totalorder %s30, 0
      %p324 = por %p322, %p323
      %s326 = sadd.s32 %s325, 1
      %p329 = scmp.eq.s32.totalorder %s24, 1
      %p330 = scmp.ne.s32.totalorder %s325, %s327
      %p331 = scmp.eq.s32.totalorder %s24, 0
      %p332 = por %p330, %p331
      %p333 = scmp.ne.s32.totalorder %s325, %s327
      %p334 = scmp.eq.s32.totalorder %s29, 1
      %p335 = por %p333, %p334
      %p336 = scmp.ne.s32.totalorder %s327, %s328
      %p337 = scmp.eq.s32.totalorder %s29, 0
      %p338 = por %p336, %p337
      %p339 = scmp.ne.s32.totalorder %s327, %s328
      %p340 = scmp.eq.s32.totalorder %s30, 1
      %p341 = por %p339, %p340
      %p343 = scmp.ne.s32.totalorder %s328, %s342
      %p344 = scmp.eq.s32.totalorder %s30, 0
      %p345 = por %p343, %p344
      %s347 = sadd.s32 %s346, 1
      %p350 = scmp.eq.s32.totalorder %s24, 1
      %p351 = scmp.ne.s32.totalorder %s346, %s348
      %p352 = scmp.eq.s32.totalorder %s24, 0
      %p353 = por %p351, %p352
      %p354 = scmp.ne.s32.totalorder %s346, %s348
      %p355 = scmp.eq.s32.totalorder %s29, 1
      %p356 = por %p354, %p355
      %p357 = scmp.ne.s32.totalorder %s348, %s349
      %p358 = scmp.eq.s32.totalorder %s29, 0
      %p359 = por %p357, %p358
      %p360 = scmp.ne.s32.totalorder %s348, %s349
      %p361 = scmp.eq.s32.totalorder %s30, 1
      %p362 = por %p360, %p361
      %p364 = scmp.ne.s32.totalorder %s349, %s363
      %p365 = scmp.eq.s32.totalorder %s30, 0
      %p366 = por %p364, %p365
      %s367 = ssub.s32 %s24, %s31
      %p368 = scmp.eq.s32.totalorder %s367, 0
      %s370 = sadd.s32 %s369, 1
      %s371 = scalar_select %p368, %s369, %s370
      %p374 = pneg %p368
      %p375 = scmp.eq.s32.totalorder %s24, 1
      %p376 = por %p374, %p375
      %p377 = scmp.ne.s32.totalorder %s369, %s372
      %p378 = scmp.eq.s32.totalorder %s24, 0
      %p379 = por %p377, %p378
      %p380 = scmp.ne.s32.totalorder %s369, %s372
      %p381 = scmp.eq.s32.totalorder %s29, 1
      %p382 = por %p380, %p381
      %p383 = scmp.ne.s32.totalorder %s372, %s373
      %p384 = scmp.eq.s32.totalorder %s29, 0
      %p385 = por %p383, %p384
      %p386 = scmp.ne.s32.totalorder %s372, %s373
      %p387 = scmp.eq.s32.totalorder %s30, 1
      %p388 = por %p386, %p387
      %p390 = scmp.ne.s32.totalorder %s373, %s389
      %p391 = scmp.eq.s32.totalorder %s30, 0
      %p392 = por %p390, %p391
      %p393 = scmp.le.s32.totalorder 1, %s24
      %p394 = scmp.lt.s32.totalorder %s24, 3
      %p395 = pnand %p393, %p394
      %p396 = pneg %p395
      // Predicated region
      $region9: #{tpu_custom_call.1} parent=5 // pred_check
        _
      $region10: #{tpu_custom_call.1} parent=5 // pred_check_branch
        %398 = sbr.rel (%p395) target = $region12
      $region11: #{tpu_custom_call.1} parent=5 // pred_region
        %s399 = ssub.s32 %s24, 1
        // Predicated region
        $region13: #{tpu_custom_call.1} parent=11 // pred_check
          %p400 = pneg %p149
        $region14: #{tpu_custom_call.1} parent=11 // pred_check_branch
          %402 = sbr.rel (%p400) target = $region16
        $region15: #{tpu_custom_call.1} parent=11 // pred_region
          _
        $region16: #{tpu_custom_call.1} parent=11 // pred_fallthru
          _
        // Predicated region
        $region17: #{tpu_custom_call.1} parent=11 // pred_check
          %p403 = pneg %p170
        $region18: #{tpu_custom_call.1} parent=11 // pred_check_branch
          %405 = sbr.rel (%p403) target = $region20
        $region19: #{tpu_custom_call.1} parent=11 // pred_region
          _
        $region20: #{tpu_custom_call.1} parent=11 // pred_fallthru
          _
        // Predicated region
        $region21: #{tpu_custom_call.1} parent=11 // pred_check
          %p406 = pneg %p191
        $region22: #{tpu_custom_call.1} parent=11 // pred_check_branch
          %408 = sbr.rel (%p406) target = $region24
        $region23: #{tpu_custom_call.1} parent=11 // pred_region
          _
        $region24: #{tpu_custom_call.1} parent=11 // pred_fallthru
          _
        // Predicated region
        $region25: #{tpu_custom_call.1} parent=11 // pred_check
          %p409 = pneg %p212
        $region26: #{tpu_custom_call.1} parent=11 // pred_check_branch
          %411 = sbr.rel (%p409) target = $region28
        $region27: #{tpu_custom_call.1} parent=11 // pred_region
          _
        $region28: #{tpu_custom_call.1} parent=11 // pred_fallthru
          _
        // Predicated region
        $region29: #{tpu_custom_call.1} parent=11 // pred_check
          %p412 = pneg %p233
        $region30: #{tpu_custom_call.1} parent=11 // pred_check_branch
          %414 = sbr.rel (%p412) target = $region32
        $region31: #{tpu_custom_call.1} parent=11 // pred_region
          _
        $region32: #{tpu_custom_call.1} parent=11 // pred_fallthru
          _
        // Predicated region
        $region33: #{tpu_custom_call.1} parent=11 // pred_check
          %p415 = pneg %p254
        $region34: #{tpu_custom_call.1} parent=11 // pred_check_branch
          %417 = sbr.rel (%p415) target = $region36
        $region35: #{tpu_custom_call.1} parent=11 // pred_region
          _
        $region36: #{tpu_custom_call.1} parent=11 // pred_fallthru
          _
        // Predicated region
        $region37: #{tpu_custom_call.1} parent=11 // pred_check
          %p418 = pneg %p275
        $region38: #{tpu_custom_call.1} parent=11 // pred_check_branch
          %420 = sbr.rel (%p418) target = $region40
        $region39: #{tpu_custom_call.1} parent=11 // pred_region
          _
        $region40: #{tpu_custom_call.1} parent=11 // pred_fallthru
          _
        // Predicated region
        $region41: #{tpu_custom_call.1} parent=11 // pred_check
          %p421 = pneg %p296
        $region42: #{tpu_custom_call.1} parent=11 // pred_check_branch
          %423 = sbr.rel (%p421) target = $region44
        $region43: #{tpu_custom_call.1} parent=11 // pred_region
          _
        $region44: #{tpu_custom_call.1} parent=11 // pred_fallthru
          _
        // Predicated region
        $region45: #{tpu_custom_call.1} parent=11 // pred_check
          %p424 = pneg %p317
        $region46: #{tpu_custom_call.1} parent=11 // pred_check_branch
          %426 = sbr.rel (%p424) target = $region48
        $region47: #{tpu_custom_call.1} parent=11 // pred_region
          _
        $region48: #{tpu_custom_call.1} parent=11 // pred_fallthru
          _
        // Predicated region
        $region49: #{tpu_custom_call.1} parent=11 // pred_check
          %p427 = pneg %p338
        $region50: #{tpu_custom_call.1} parent=11 // pred_check_branch
          %429 = sbr.rel (%p427) target = $region52
        $region51: #{tpu_custom_call.1} parent=11 // pred_region
          _
        $region52: #{tpu_custom_call.1} parent=11 // pred_fallthru
          _
        // Predicated region
        $region53: #{tpu_custom_call.1} parent=11 // pred_check
          %p430 = pneg %p359
        $region54: #{tpu_custom_call.1} parent=11 // pred_check_branch
          %432 = sbr.rel (%p430) target = $region56
        $region55: #{tpu_custom_call.1} parent=11 // pred_region
          _
        $region56: #{tpu_custom_call.1} parent=11 // pred_fallthru
          _
      $region12: #{tpu_custom_call.1} parent=5 // pred_fallthru
        _
      %p433 = scmp.lt.s32.totalorder %s24, 2
      // Predicated region
      $region57: #{tpu_custom_call.1} parent=5 // pred_check
        %p434 = pneg %p433
      $region58: #{tpu_custom_call.1} parent=5 // pred_check_branch
        %436 = sbr.rel (%p434) target = $region60
      $region59: #{tpu_custom_call.1} parent=5 // pred_region
        // Predicated region
        $region61: #{tpu_custom_call.1} parent=59 // pred_check
          %p437 = pneg %p44
        $region62: #{tpu_custom_call.1} parent=59 // pred_check_branch
          %439 = sbr.rel (%p437) target = $region64
        $region63: #{tpu_custom_call.1} parent=59 // pred_region
          %p440 = scmp.lt.s32.totalorder %s24, 1
          %s441 = scalar_select %p440, %s24, 1
          %s442 = smul.addr %s441, 4
          %s443 = scalar_lea.vmem %s0, %s442
        $region64: #{tpu_custom_call.1} parent=59 // pred_fallthru
          _
        // Predicated region
        $region65: #{tpu_custom_call.1} parent=59 // pred_check
          %p444 = pneg %p70
        $region66: #{tpu_custom_call.1} parent=59 // pred_check_branch
          %446 = sbr.rel (%p444) target = $region68
        $region67: #{tpu_custom_call.1} parent=59 // pred_region
          %p447 = scmp.lt.s32.totalorder %s24, 1
          %s448 = scalar_select %p447, %s24, 1
          %s449 = smul.addr %s448, 4
          %s450 = scalar_lea.vmem %s1, %s449
        $region68: #{tpu_custom_call.1} parent=59 // pred_fallthru
          _
        // Predicated region
        $region69: #{tpu_custom_call.1} parent=59 // pred_check
          %p451 = pneg %p96
        $region70: #{tpu_custom_call.1} parent=59 // pred_check_branch
          %453 = sbr.rel (%p451) target = $region72
        $region71: #{tpu_custom_call.1} parent=59 // pred_region
          %p454 = scmp.lt.s32.totalorder %s24, 1
          %s455 = scalar_select %p454, %s24, 1
          %s456 = smul.addr %s455, 4
          %s457 = scalar_lea.vmem %s2, %s456
        $region72: #{tpu_custom_call.1} parent=59 // pred_fallthru
          _
        // Predicated region
        $region73: #{tpu_custom_call.1} parent=59 // pred_check
          %p458 = pneg %p122
        $region74: #{tpu_custom_call.1} parent=59 // pred_check_branch
          %460 = sbr.rel (%p458) target = $region76
        $region75: #{tpu_custom_call.1} parent=59 // pred_region
          %p461 = scmp.lt.s32.totalorder %s24, 1
          %s462 = scalar_select %p461, %s24, 1
          %s463 = scalar_lea.vmem %s3, %s462
        $region76: #{tpu_custom_call.1} parent=59 // pred_fallthru
          _
      $region60: #{tpu_custom_call.1} parent=5 // pred_fallthru
        _
      %p464 = scmp.le.s32.totalorder 1, %s24
      %p465 = scmp.lt.s32.totalorder %s24, 3
      %p466 = pnand %p464, %p465
      %p467 = pneg %p466
      // Predicated region
      $region77: #{tpu_custom_call.1} parent=5 // pred_check
        _
      $region78: #{tpu_custom_call.1} parent=5 // pred_check_branch
        %469 = sbr.rel (%p466) target = $region80
      $region79: #{tpu_custom_call.1} parent=5 // pred_region
        %s470 = ssub.s32 %s24, 1
        %p471 = scmp.lt.s32.totalorder %s29, 1
        %s472 = scalar_select %p471, %s29, 1
        %s473 = smul.addr %s472, 4
        %s474 = scalar_lea.vmem %s0, %s473
        %p475 = pneg %p50
        %p476 = pneg %p47
        %p477 = scmp.lt.s32.totalorder %s29, 1
        %s478 = scalar_select %p477, %s29, 1
        %s479 = smul.addr %s478, 4
        %s480 = scalar_lea.vmem %s1, %s479
        %p481 = pneg %p76
        %p482 = pneg %p73
        %p483 = scmp.lt.s32.totalorder %s29, 1
        %s484 = scalar_select %p483, %s29, 1
        %s485 = smul.addr %s484, 4
        %s486 = scalar_lea.vmem %s2, %s485
        %p487 = pneg %p102
        %p488 = pneg %p99
        %p489 = scmp.lt.s32.totalorder %s29, 1
        %s490 = scalar_select %p489, %s29, 1
        %s491 = scalar_lea.vmem %s3, %s490
        %p492 = pneg %p128
        %p493 = pneg %p125
        %p494 = pneg %p149
        %p495 = pneg %p146
        %p496 = pneg %p170
        %p497 = pneg %p167
        %p498 = pneg %p191
        %p499 = pneg %p188
        %p500 = pneg %p212
        %p501 = pneg %p209
        %p502 = pneg %p233
        %p503 = pneg %p230
        %p504 = pneg %p254
        %p505 = pneg %p251
        %p506 = pneg %p275
        %p507 = pneg %p272
        %p508 = pneg %p296
        %p509 = pneg %p293
        %p510 = pneg %p317
        %p511 = pneg %p314
        %p512 = pneg %p338
        %p513 = pneg %p335
        %p514 = pneg %p359
        %p515 = pneg %p356
        %p516 = pneg %p385
        %p517 = pneg %p382
        %s518 = sand.u32 %s372, 1
        %s519 = scalar_lea.sflag [#allocation3], %s518
        %s520 = sand.u32 %s372, 1
        %s521 = smul.addr %s520, 8
        %s522 = scalar_lea.vmem [#allocation2], %s521
        %p523 = scmp.lt.s32.totalorder %s29, 1
        %s524 = scalar_select %p523, %s29, 1
        %s525 = smul.addr %s524, 4
        %s526 = scalar_lea.vmem %s0, %s525
        %p527 = scmp.lt.s32.totalorder %s29, 1
        %s528 = scalar_select %p527, %s29, 1
        %s529 = smul.addr %s528, 4
        %s530 = scalar_lea.vmem %s1, %s529
        %p531 = scmp.lt.s32.totalorder %s29, 1
        %s532 = scalar_select %p531, %s29, 1
        %s533 = smul.addr %s532, 4
        %s534 = scalar_lea.vmem %s2, %s533
        %p535 = scmp.lt.s32.totalorder %s29, 1
        %s536 = scalar_select %p535, %s29, 1
        %s537 = scalar_lea.vmem %s3, %s536
        %v539 = vld [vmem:[%s526] sm:$0xf]
        %v540 = vld [vmem:[%s530] sm:$0xf]
        %v541 = vld [vmem:[%s534] sm:$0xf]
        %v542 = vld [vmem:[%s537] sm:$0x1]
        %v543 = vld [vmem:[%s5] sm:$0xf]
        %v544 = vld [vmem:[%s5 + $0x4] sm:$0xf]
        %v545 = vld [vmem:[%s5 + $0x8] sm:$0xf]
        %v546 = vld [vmem:[%s5 + $0xc] sm:$0xf]
        %v547 = vld [vmem:[%s5 + $0x10] sm:$0xf]
        %v548 = vld [vmem:[%s5 + $0x14] sm:$0xf]
        %v549 = vld [vmem:[%s5 + $0x18] sm:$0xf]
        %v550 = vld [vmem:[%s5 + $0x1c] sm:$0xf]
        %v551 = vld [vmem:[%s5 + $0x20] sm:$0xf]
        %v552 = vld [vmem:[%s5 + $0x24] sm:$0xf]
        %v553 = vld [vmem:[%s5 + $0x28] sm:$0xf]
        %v554 = vld [vmem:[%s5 + $0x2c] sm:$0xf]
        %v555 = vld [vmem:[%s5 + $0x30] sm:$0xf]
        %v556 = vld [vmem:[%s5 + $0x34] sm:$0xf]
        %v557 = vld [vmem:[%s5 + $0x38] sm:$0xf]
        %v558 = vld [vmem:[%s5 + $0x3c] sm:$0xf]
        %v559 = vld [vmem:[%s6] sm:$0x1]
        %v560 = vld [vmem:[%s6 + $0x1] sm:$0x1]
        %v561 = vld [vmem:[%s6 + $0x2] sm:$0x1]
        %v562 = vld [vmem:[%s6 + $0x3] sm:$0x1]
        %v567 = vlaneseq
        %v568 = vshrl.u32 %v567, 7
        %v569 = vsub.s32 0, %v568
        %v570 = vrot.slane %v559, %v569
        %v571 = vlaneseq
        %v572 = vshrl.u32 %v571, 7
        %v573 = vsub.s32 0, %v572
        %v574 = vrot.slane %v560, %v573
        %v575 = vlaneseq
        %v576 = vshrl.u32 %v575, 7
        %v577 = vsub.s32 0, %v576
        %v578 = vrot.slane %v561, %v577
        %v579 = vlaneseq
        %v580 = vshrl.u32 %v579, 7
        %v581 = vsub.s32 0, %v580
        %v582 = vrot.slane %v562, %v581
        %v591 = vunpack.c.l.b16 %v543
        %v592 = vunpack.c.l.b16 %v544
        %v593 = vunpack.c.l.b16 %v545
        %v594 = vunpack.c.l.b16 %v546
        %v595 = vpack.c.b16 %v592, %v591
        %v596 = vpack.c.b16 %v594, %v593
        %vm599 = vcmask 261120
        %v601 = vsel %vm599, %v539, 0
        %603 = vmatprep.subr.bf16.mxu0 0
        %604 = vmatpush1.bf16.msra.mxu0 %v595
        %605 = vmatprep.subr.bf16.mxu0 0
        %606 = vmatpush1.bf16.msra.mxu0 %v596
        %607 = vmatprep.subr.bf16.mxu0 0
        %608 = vmatpush1.bf16.msra.mxu0 0
        %609 = vmatprep.subr.bf16.mxu0 0
        %610 = vmatpush1.bf16.msra.mxu0 0
        %611 = vmatprep.subr.bf16.mxu0 0
        %612 = vmatpush1.bf16.msra.mxu0 0
        %613 = vmatprep.subr.bf16.mxu0 0
        %614 = vmatpush1.bf16.msra.mxu0 0
        %615 = vmatprep.subr.bf16.mxu0 0
        %616 = vmatpush1.bf16.msra.mxu0 0
        %617 = vmatprep.subr.bf16.mxu0 0
        %618 = vmatpush1.bf16.msra.mxu0 0
        %619 = vmatprep.subr.bf16.mxu0 0
        %620 = vmatpush1.bf16.msra.mxu0 0
        %621 = vmatprep.subr.bf16.mxu0 0
        %622 = vmatpush1.bf16.msra.mxu0 0
        %623 = vmatprep.subr.bf16.mxu0 0
        %624 = vmatpush1.bf16.msra.mxu0 0
        %625 = vmatprep.subr.bf16.mxu0 0
        %626 = vmatpush1.bf16.msra.mxu0 0
        %627 = vmatprep.subr.bf16.mxu0 0
        %628 = vmatpush1.bf16.msra.mxu0 0
        %629 = vmatprep.subr.bf16.mxu0 0
        %630 = vmatpush1.bf16.msra.mxu0 0
        %631 = vmatprep.subr.bf16.mxu0 0
        %632 = vmatpush1.bf16.msra.mxu0 0
        %633 = vmatprep.subr.bf16.mxu0 0
        %634 = vmatpush1.bf16.msra.mxu0 0
        %635 = vmatprep.mubr.bf16.mxu0 0
        %636 = vmatmul.mubr.bf16.gmra.mrb[0].mxu0 %v601
        %v637 = vpop.f32.mrb[0].mxu0
        %v638 = vadd.f32 %v570, %v637
        %v639 = vpop.f32.mrb[0].mxu0
        %v640 = vpop.f32.mrb[0].mxu0
        %v641 = vpop.f32.mrb[0].mxu0
        %642 = vdwg.mxu0
        %v647 = vunpack.c.l.b16 %v547
        %v648 = vunpack.c.l.b16 %v548
        %v649 = vunpack.c.l.b16 %v549
        %v650 = vunpack.c.l.b16 %v550
        %v651 = vpack.c.b16 %v648, %v647
        %v652 = vpack.c.b16 %v650, %v649
        %655 = vmatprep.subr.bf16.mxu0 0
        %656 = vmatpush1.bf16.msra.mxu0 %v651
        %657 = vmatprep.subr.bf16.mxu0 0
        %658 = vmatpush1.bf16.msra.mxu0 %v652
        %659 = vmatprep.subr.bf16.mxu0 0
        %660 = vmatpush1.bf16.msra.mxu0 0
        %661 = vmatprep.subr.bf16.mxu0 0
        %662 = vmatpush1.bf16.msra.mxu0 0
        %663 = vmatprep.subr.bf16.mxu0 0
        %664 = vmatpush1.bf16.msra.mxu0 0
        %665 = vmatprep.subr.bf16.mxu0 0
        %666 = vmatpush1.bf16.msra.mxu0 0
        %667 = vmatprep.subr.bf16.mxu0 0
        %668 = vmatpush1.bf16.msra.mxu0 0
        %669 = vmatprep.subr.bf16.mxu0 0
        %670 = vmatpush1.bf16.msra.mxu0 0
        %671 = vmatprep.subr.bf16.mxu0 0
        %672 = vmatpush1.bf16.msra.mxu0 0
        %673 = vmatprep.subr.bf16.mxu0 0
        %674 = vmatpush1.bf16.msra.mxu0 0
        %675 = vmatprep.subr.bf16.mxu0 0
        %676 = vmatpush1.bf16.msra.mxu0 0
        %677 = vmatprep.subr.bf16.mxu0 0
        %678 = vmatpush1.bf16.msra.mxu0 0
        %679 = vmatprep.subr.bf16.mxu0 0
        %680 = vmatpush1.bf16.msra.mxu0 0
        %681 = vmatprep.subr.bf16.mxu0 0
        %682 = vmatpush1.bf16.msra.mxu0 0
        %683 = vmatprep.subr.bf16.mxu0 0
        %684 = vmatpush1.bf16.msra.mxu0 0
        %685 = vmatprep.subr.bf16.mxu0 0
        %686 = vmatpush1.bf16.msra.mxu0 0
        %687 = vmatprep.mubr.bf16.mxu0 0
        %688 = vmatmul.mubr.bf16.gmra.mrb[0].mxu0 %v601
        %v689 = vpop.f32.mrb[0].mxu0
        %v690 = vadd.f32 %v574, %v689
        %v691 = vpop.f32.mrb[0].mxu0
        %v692 = vpop.f32.mrb[0].mxu0
        %v693 = vpop.f32.mrb[0].mxu0
        %694 = vdwg.mxu0
        %v699 = vunpack.c.l.b16 %v551
        %v700 = vunpack.c.l.b16 %v552
        %v701 = vunpack.c.l.b16 %v553
        %v702 = vunpack.c.l.b16 %v554
        %v703 = vpack.c.b16 %v700, %v699
        %v704 = vpack.c.b16 %v702, %v701
        %707 = vmatprep.subr.bf16.mxu0 0
        %708 = vmatpush1.bf16.msra.mxu0 %v703
        %709 = vmatprep.subr.bf16.mxu0 0
        %710 = vmatpush1.bf16.msra.mxu0 %v704
        %711 = vmatprep.subr.bf16.mxu0 0
        %712 = vmatpush1.bf16.msra.mxu0 0
        %713 = vmatprep.subr.bf16.mxu0 0
        %714 = vmatpush1.bf16.msra.mxu0 0
        %715 = vmatprep.subr.bf16.mxu0 0
        %716 = vmatpush1.bf16.msra.mxu0 0
        %717 = vmatprep.subr.bf16.mxu0 0
        %718 = vmatpush1.bf16.msra.mxu0 0
        %719 = vmatprep.subr.bf16.mxu0 0
        %720 = vmatpush1.bf16.msra.mxu0 0
        %721 = vmatprep.subr.bf16.mxu0 0
        %722 = vmatpush1.bf16.msra.mxu0 0
        %723 = vmatprep.subr.bf16.mxu0 0
        %724 = vmatpush1.bf16.msra.mxu0 0
        %725 = vmatprep.subr.bf16.mxu0 0
        %726 = vmatpush1.bf16.msra.mxu0 0
        %727 = vmatprep.subr.bf16.mxu0 0
        %728 = vmatpush1.bf16.msra.mxu0 0
        %729 = vmatprep.subr.bf16.mxu0 0
        %730 = vmatpush1.bf16.msra.mxu0 0
        %731 = vmatprep.subr.bf16.mxu0 0
        %732 = vmatpush1.bf16.msra.mxu0 0
        %733 = vmatprep.subr.bf16.mxu0 0
        %734 = vmatpush1.bf16.msra.mxu0 0
        %735 = vmatprep.subr.bf16.mxu0 0
        %736 = vmatpush1.bf16.msra.mxu0 0
        %737 = vmatprep.subr.bf16.mxu0 0
        %738 = vmatpush1.bf16.msra.mxu0 0
        %739 = vmatprep.mubr.bf16.mxu0 0
        %740 = vmatmul.mubr.bf16.gmra.mrb[0].mxu0 %v601
        %v741 = vpop.f32.mrb[0].mxu0
        %v742 = vadd.f32 %v578, %v741
        %v743 = vpop.f32.mrb[0].mxu0
        %v744 = vpop.f32.mrb[0].mxu0
        %v745 = vpop.f32.mrb[0].mxu0
        %746 = vdwg.mxu0
        %v751 = vunpack.c.l.b16 %v555
        %v752 = vunpack.c.l.b16 %v556
        %v753 = vunpack.c.l.b16 %v557
        %v754 = vunpack.c.l.b16 %v558
        %v755 = vpack.c.b16 %v752, %v751
        %v756 = vpack.c.b16 %v754, %v753
        %759 = vmatprep.subr.bf16.mxu0 0
        %760 = vmatpush1.bf16.msra.mxu0 %v755
        %761 = vmatprep.subr.bf16.mxu0 0
        %762 = vmatpush1.bf16.msra.mxu0 %v756
        %763 = vmatprep.subr.bf16.mxu0 0
        %764 = vmatpush1.bf16.msra.mxu0 0
        %765 = vmatprep.subr.bf16.mxu0 0
        %766 = vmatpush1.bf16.msra.mxu0 0
        %767 = vmatprep.subr.bf16.mxu0 0
        %768 = vmatpush1.bf16.msra.mxu0 0
        %769 = vmatprep.subr.bf16.mxu0 0
        %770 = vmatpush1.bf16.msra.mxu0 0
        %771 = vmatprep.subr.bf16.mxu0 0
        %772 = vmatpush1.bf16.msra.mxu0 0
        %773 = vmatprep.subr.bf16.mxu0 0
        %774 = vmatpush1.bf16.msra.mxu0 0
        %775 = vmatprep.subr.bf16.mxu0 0
        %776 = vmatpush1.bf16.msra.mxu0 0
        %777 = vmatprep.subr.bf16.mxu0 0
        %778 = vmatpush1.bf16.msra.mxu0 0
        %779 = vmatprep.subr.bf16.mxu0 0
        %780 = vmatpush1.bf16.msra.mxu0 0
        %781 = vmatprep.subr.bf16.mxu0 0
        %782 = vmatpush1.bf16.msra.mxu0 0
        %783 = vmatprep.subr.bf16.mxu0 0
        %784 = vmatpush1.bf16.msra.mxu0 0
        %785 = vmatprep.subr.bf16.mxu0 0
        %786 = vmatpush1.bf16.msra.mxu0 0
        %787 = vmatprep.subr.bf16.mxu0 0
        %788 = vmatpush1.bf16.msra.mxu0 0
        %789 = vmatprep.subr.bf16.mxu0 0
        %790 = vmatpush1.bf16.msra.mxu0 0
        %791 = vmatprep.mubr.bf16.mxu0 0
        %792 = vmatmul.mubr.bf16.gmra.mrb[0].mxu0 %v601
        %v793 = vpop.f32.mrb[0].mxu0
        %v794 = vadd.f32 %v582, %v793
        %v795 = vpop.f32.mrb[0].mxu0
        %v796 = vpop.f32.mrb[0].mxu0
        %v797 = vpop.f32.mrb[0].mxu0
        %798 = vdwg.mxu0
        %v799 = vld [vmem:[%s7] sm:$0xf]
        %v800 = vld [vmem:[%s7 + $0x4] sm:$0xf]
        %v801 = vld [vmem:[%s7 + $0x8] sm:$0xf]
        %v802 = vld [vmem:[%s7 + $0xc] sm:$0xf]
        %v803 = vld [vmem:[%s7 + $0x10] sm:$0xf]
        %v804 = vld [vmem:[%s7 + $0x14] sm:$0xf]
        %v805 = vld [vmem:[%s7 + $0x18] sm:$0xf]
        %v806 = vld [vmem:[%s7 + $0x1c] sm:$0xf]
        %v807 = vld [vmem:[%s7 + $0x20] sm:$0xf]
        %v808 = vld [vmem:[%s7 + $0x24] sm:$0xf]
        %v809 = vld [vmem:[%s7 + $0x28] sm:$0xf]
        %v810 = vld [vmem:[%s7 + $0x2c] sm:$0xf]
        %v811 = vld [vmem:[%s7 + $0x30] sm:$0xf]
        %v812 = vld [vmem:[%s7 + $0x34] sm:$0xf]
        %v813 = vld [vmem:[%s7 + $0x38] sm:$0xf]
        %v814 = vld [vmem:[%s7 + $0x3c] sm:$0xf]
        %v815 = vld [vmem:[%s8] sm:$0x1]
        %v816 = vld [vmem:[%s8 + $0x1] sm:$0x1]
        %v817 = vld [vmem:[%s8 + $0x2] sm:$0x1]
        %v818 = vld [vmem:[%s8 + $0x3] sm:$0x1]
        %v823 = vlaneseq
        %v824 = vshrl.u32 %v823, 7
        %v825 = vsub.s32 0, %v824
        %v826 = vrot.slane %v815, %v825
        %v827 = vlaneseq
        %v828 = vshrl.u32 %v827, 7
        %v829 = vsub.s32 0, %v828
        %v830 = vrot.slane %v816, %v829
        %v831 = vlaneseq
        %v832 = vshrl.u32 %v831, 7
        %v833 = vsub.s32 0, %v832
        %v834 = vrot.slane %v817, %v833
        %v835 = vlaneseq
        %v836 = vshrl.u32 %v835, 7
        %v837 = vsub.s32 0, %v836
        %v838 = vrot.slane %v818, %v837
        %v847 = vunpack.c.l.b16 %v799
        %v848 = vunpack.c.l.b16 %v800
        %v849 = vunpack.c.l.b16 %v801
        %v850 = vunpack.c.l.b16 %v802
        %v851 = vpack.c.b16 %v848, %v847
        %v852 = vpack.c.b16 %v850, %v849
        %v856 = vsel %vm599, %v540, 0
        %858 = vmatprep.subr.bf16.mxu0 0
        %859 = vmatpush1.bf16.msra.mxu0 %v851
        %860 = vmatprep.subr.bf16.mxu0 0
        %861 = vmatpush1.bf16.msra.mxu0 %v852
        %862 = vmatprep.subr.bf16.mxu0 0
        %863 = vmatpush1.bf16.msra.mxu0 0
        %864 = vmatprep.subr.bf16.mxu0 0
        %865 = vmatpush1.bf16.msra.mxu0 0
        %866 = vmatprep.subr.bf16.mxu0 0
        %867 = vmatpush1.bf16.msra.mxu0 0
        %868 = vmatprep.subr.bf16.mxu0 0
        %869 = vmatpush1.bf16.msra.mxu0 0
        %870 = vmatprep.subr.bf16.mxu0 0
        %871 = vmatpush1.bf16.msra.mxu0 0
        %872 = vmatprep.subr.bf16.mxu0 0
        %873 = vmatpush1.bf16.msra.mxu0 0
        %874 = vmatprep.subr.bf16.mxu0 0
        %875 = vmatpush1.bf16.msra.mxu0 0
        %876 = vmatprep.subr.bf16.mxu0 0
        %877 = vmatpush1.bf16.msra.mxu0 0
        %878 = vmatprep.subr.bf16.mxu0 0
        %879 = vmatpush1.bf16.msra.mxu0 0
        %880 = vmatprep.subr.bf16.mxu0 0
        %881 = vmatpush1.bf16.msra.mxu0 0
        %882 = vmatprep.subr.bf16.mxu0 0
        %883 = vmatpush1.bf16.msra.mxu0 0
        %884 = vmatprep.subr.bf16.mxu0 0
        %885 = vmatpush1.bf16.msra.mxu0 0
        %886 = vmatprep.subr.bf16.mxu0 0
        %887 = vmatpush1.bf16.msra.mxu0 0
        %888 = vmatprep.subr.bf16.mxu0 0
        %889 = vmatpush1.bf16.msra.mxu0 0
        %890 = vmatprep.mubr.bf16.mxu0 0
        %891 = vmatmul.mubr.bf16.gmra.mrb[0].mxu0 %v856
        %v892 = vpop.f32.mrb[0].mxu0
        %v893 = vadd.f32 %v826, %v892
        %v894 = vpop.f32.mrb[0].mxu0
        %v895 = vpop.f32.mrb[0].mxu0
        %v896 = vpop.f32.mrb[0].mxu0
        %897 = vdwg.mxu0
        %v902 = vunpack.c.l.b16 %v803
        %v903 = vunpack.c.l.b16 %v804
        %v904 = vunpack.c.l.b16 %v805
        %v905 = vunpack.c.l.b16 %v806
        %v906 = vpack.c.b16 %v903, %v902
        %v907 = vpack.c.b16 %v905, %v904
        %910 = vmatprep.subr.bf16.mxu0 0
        %911 = vmatpush1.bf16.msra.mxu0 %v906
        %912 = vmatprep.subr.bf16.mxu0 0
        %913 = vmatpush1.bf16.msra.mxu0 %v907
        %914 = vmatprep.subr.bf16.mxu0 0
        %915 = vmatpush1.bf16.msra.mxu0 0
        %916 = vmatprep.subr.bf16.mxu0 0
        %917 = vmatpush1.bf16.msra.mxu0 0
        %918 = vmatprep.subr.bf16.mxu0 0
        %919 = vmatpush1.bf16.msra.mxu0 0
        %920 = vmatprep.subr.bf16.mxu0 0
        %921 = vmatpush1.bf16.msra.mxu0 0
        %922 = vmatprep.subr.bf16.mxu0 0
        %923 = vmatpush1.bf16.msra.mxu0 0
        %924 = vmatprep.subr.bf16.mxu0 0
        %925 = vmatpush1.bf16.msra.mxu0 0
        %926 = vmatprep.subr.bf16.mxu0 0
        %927 = vmatpush1.bf16.msra.mxu0 0
        %928 = vmatprep.subr.bf16.mxu0 0
        %929 = vmatpush1.bf16.msra.mxu0 0
        %930 = vmatprep.subr.bf16.mxu0 0
        %931 = vmatpush1.bf16.msra.mxu0 0
        %932 = vmatprep.subr.bf16.mxu0 0
        %933 = vmatpush1.bf16.msra.mxu0 0
        %934 = vmatprep.subr.bf16.mxu0 0
        %935 = vmatpush1.bf16.msra.mxu0 0
        %936 = vmatprep.subr.bf16.mxu0 0
        %937 = vmatpush1.bf16.msra.mxu0 0
        %938 = vmatprep.subr.bf16.mxu0 0
        %939 = vmatpush1.bf16.msra.mxu0 0
        %940 = vmatprep.subr.bf16.mxu0 0
        %941 = vmatpush1.bf16.msra.mxu0 0
        %942 = vmatprep.mubr.bf16.mxu0 0
        %943 = vmatmul.mubr.bf16.gmra.mrb[0].mxu0 %v856
        %v944 = vpop.f32.mrb[0].mxu0
        %v945 = vadd.f32 %v830, %v944
        %v946 = vpop.f32.mrb[0].mxu0
        %v947 = vpop.f32.mrb[0].mxu0
        %v948 = vpop.f32.mrb[0].mxu0
        %949 = vdwg.mxu0
        %v954 = vunpack.c.l.b16 %v807
        %v955 = vunpack.c.l.b16 %v808
        %v956 = vunpack.c.l.b16 %v809
        %v957 = vunpack.c.l.b16 %v810
        %v958 = vpack.c.b16 %v955, %v954
        %v959 = vpack.c.b16 %v957, %v956
        %962 = vmatprep.subr.bf16.mxu0 0
        %963 = vmatpush1.bf16.msra.mxu0 %v958
        %964 = vmatprep.subr.bf16.mxu0 0
        %965 = vmatpush1.bf16.msra.mxu0 %v959
        %966 = vmatprep.subr.bf16.mxu0 0
        %967 = vmatpush1.bf16.msra.mxu0 0
        %968 = vmatprep.subr.bf16.mxu0 0
        %969 = vmatpush1.bf16.msra.mxu0 0
        %970 = vmatprep.subr.bf16.mxu0 0
        %971 = vmatpush1.bf16.msra.mxu0 0
        %972 = vmatprep.subr.bf16.mxu0 0
        %973 = vmatpush1.bf16.msra.mxu0 0
        %974 = vmatprep.subr.bf16.mxu0 0
        %975 = vmatpush1.bf16.msra.mxu0 0
        %976 = vmatprep.subr.bf16.mxu0 0
        %977 = vmatpush1.bf16.msra.mxu0 0
        %978 = vmatprep.subr.bf16.mxu0 0
        %979 = vmatpush1.bf16.msra.mxu0 0
        %980 = vmatprep.subr.bf16.mxu0 0
        %981 = vmatpush1.bf16.msra.mxu0 0
        %982 = vmatprep.subr.bf16.mxu0 0
        %983 = vmatpush1.bf16.msra.mxu0 0
        %984 = vmatprep.subr.bf16.mxu0 0
        %985 = vmatpush1.bf16.msra.mxu0 0
        %986 = vmatprep.subr.bf16.mxu0 0
        %987 = vmatpush1.bf16.msra.mxu0 0
        %988 = vmatprep.subr.bf16.mxu0 0
        %989 = vmatpush1.bf16.msra.mxu0 0
        %990 = vmatprep.subr.bf16.mxu0 0
        %991 = vmatpush1.bf16.msra.mxu0 0
        %992 = vmatprep.subr.bf16.mxu0 0
        %993 = vmatpush1.bf16.msra.mxu0 0
        %994 = vmatprep.mubr.bf16.mxu0 0
        %995 = vmatmul.mubr.bf16.gmra.mrb[0].mxu0 %v856
        %v996 = vpop.f32.mrb[0].mxu0
        %v997 = vadd.f32 %v834, %v996
        %v998 = vpop.f32.mrb[0].mxu0
        %v999 = vpop.f32.mrb[0].mxu0
        %v1000 = vpop.f32.mrb[0].mxu0
        %1001 = vdwg.mxu0
        %v1006 = vunpack.c.l.b16 %v811
        %v1007 = vunpack.c.l.b16 %v812
        %v1008 = vunpack.c.l.b16 %v813
        %v1009 = vunpack.c.l.b16 %v814
        %v1010 = vpack.c.b16 %v1007, %v1006
        %v1011 = vpack.c.b16 %v1009, %v1008
        %1014 = vmatprep.subr.bf16.mxu0 0
        %1015 = vmatpush1.bf16.msra.mxu0 %v1010
        %1016 = vmatprep.subr.bf16.mxu0 0
        %1017 = vmatpush1.bf16.msra.mxu0 %v1011
        %1018 = vmatprep.subr.bf16.mxu0 0
        %1019 = vmatpush1.bf16.msra.mxu0 0
        %1020 = vmatprep.subr.bf16.mxu0 0
        %1021 = vmatpush1.bf16.msra.mxu0 0
        %1022 = vmatprep.subr.bf16.mxu0 0
        %1023 = vmatpush1.bf16.msra.mxu0 0
        %1024 = vmatprep.subr.bf16.mxu0 0
        %1025 = vmatpush1.bf16.msra.mxu0 0
        %1026 = vmatprep.subr.bf16.mxu0 0
        %1027 = vmatpush1.bf16.msra.mxu0 0
        %1028 = vmatprep.subr.bf16.mxu0 0
        %1029 = vmatpush1.bf16.msra.mxu0 0
        %1030 = vmatprep.subr.bf16.mxu0 0
        %1031 = vmatpush1.bf16.msra.mxu0 0
        %1032 = vmatprep.subr.bf16.mxu0 0
        %1033 = vmatpush1.bf16.msra.mxu0 0
        %1034 = vmatprep.subr.bf16.mxu0 0
        %1035 = vmatpush1.bf16.msra.mxu0 0
        %1036 = vmatprep.subr.bf16.mxu0 0
        %1037 = vmatpush1.bf16.msra.mxu0 0
        %1038 = vmatprep.subr.bf16.mxu0 0
        %1039 = vmatpush1.bf16.msra.mxu0 0
        %1040 = vmatprep.subr.bf16.mxu0 0
        %1041 = vmatpush1.bf16.msra.mxu0 0
        %1042 = vmatprep.subr.bf16.mxu0 0
        %1043 = vmatpush1.bf16.msra.mxu0 0
        %1044 = vmatprep.subr.bf16.mxu0 0
        %1045 = vmatpush1.bf16.msra.mxu0 0
        %1046 = vmatprep.mubr.bf16.mxu0 0
        %1047 = vmatmul.mubr.bf16.gmra.mrb[0].mxu0 %v856
        %v1048 = vpop.f32.mrb[0].mxu0
        %v1049 = vadd.f32 %v838, %v1048
        %v1050 = vpop.f32.mrb[0].mxu0
        %v1051 = vpop.f32.mrb[0].mxu0
        %v1052 = vpop.f32.mrb[0].mxu0
        %1053 = vdwg.mxu0
        %v1054 = vpack.c.bf16 %v893, %v893
        %v1055 = vpack.c.bf16 %v945, %v945
        %v1056 = vpack.c.bf16 %v997, %v997
        %v1057 = vpack.c.bf16 %v1049, %v1049
        %v1058 = vld [vmem:[%s9] sm:$0xf]
        %v1059 = vld [vmem:[%s9 + $0x4] sm:$0xf]
        %v1060 = vld [vmem:[%s9 + $0x8] sm:$0xf]
        %v1061 = vld [vmem:[%s9 + $0xc] sm:$0xf]
        %v1062 = vld [vmem:[%s9 + $0x10] sm:$0xf]
        %v1063 = vld [vmem:[%s9 + $0x14] sm:$0xf]
        %v1064 = vld [vmem:[%s9 + $0x18] sm:$0xf]
        %v1065 = vld [vmem:[%s9 + $0x1c] sm:$0xf]
        %v1066 = vld [vmem:[%s9 + $0x20] sm:$0xf]
        %v1067 = vld [vmem:[%s9 + $0x24] sm:$0xf]
        %v1068 = vld [vmem:[%s9 + $0x28] sm:$0xf]
        %v1069 = vld [vmem:[%s9 + $0x2c] sm:$0xf]
        %v1070 = vld [vmem:[%s9 + $0x30] sm:$0xf]
        %v1071 = vld [vmem:[%s9 + $0x34] sm:$0xf]
        %v1072 = vld [vmem:[%s9 + $0x38] sm:$0xf]
        %v1073 = vld [vmem:[%s9 + $0x3c] sm:$0xf]
        %v1074 = vld [vmem:[%s10] sm:$0x1]
        %v1075 = vld [vmem:[%s10 + $0x1] sm:$0x1]
        %v1076 = vld [vmem:[%s10 + $0x2] sm:$0x1]
        %v1077 = vld [vmem:[%s10 + $0x3] sm:$0x1]
        %v1082 = vlaneseq
        %v1083 = vshrl.u32 %v1082, 7
        %v1084 = vsub.s32 0, %v1083
        %v1085 = vrot.slane %v1074, %v1084
        %v1086 = vlaneseq
        %v1087 = vshrl.u32 %v1086, 7
        %v1088 = vsub.s32 0, %v1087
        %v1089 = vrot.slane %v1075, %v1088
        %v1090 = vlaneseq
        %v1091 = vshrl.u32 %v1090, 7
        %v1092 = vsub.s32 0, %v1091
        %v1093 = vrot.slane %v1076, %v1092
        %v1094 = vlaneseq
        %v1095 = vshrl.u32 %v1094, 7
        %v1096 = vsub.s32 0, %v1095
        %v1097 = vrot.slane %v1077, %v1096
        %v1106 = vunpack.c.l.b16 %v1058
        %v1107 = vunpack.c.l.b16 %v1059
        %v1108 = vunpack.c.l.b16 %v1060
        %v1109 = vunpack.c.l.b16 %v1061
        %v1110 = vpack.c.b16 %v1107, %v1106
        %v1111 = vpack.c.b16 %v1109, %v1108
        %v1115 = vsel %vm599, %v541, 0
        %1117 = vmatprep.subr.bf16.mxu0 0
        %1118 = vmatpush1.bf16.msra.mxu0 %v1110
        %1119 = vmatprep.subr.bf16.mxu0 0
        %1120 = vmatpush1.bf16.msra.mxu0 %v1111
        %1121 = vmatprep.subr.bf16.mxu0 0
        %1122 = vmatpush1.bf16.msra.mxu0 0
        %1123 = vmatprep.subr.bf16.mxu0 0
        %1124 = vmatpush1.bf16.msra.mxu0 0
        %1125 = vmatprep.subr.bf16.mxu0 0
        %1126 = vmatpush1.bf16.msra.mxu0 0
        %1127 = vmatprep.subr.bf16.mxu0 0
        %1128 = vmatpush1.bf16.msra.mxu0 0
        %1129 = vmatprep.subr.bf16.mxu0 0
        %1130 = vmatpush1.bf16.msra.mxu0 0
        %1131 = vmatprep.subr.bf16.mxu0 0
        %1132 = vmatpush1.bf16.msra.mxu0 0
        %1133 = vmatprep.subr.bf16.mxu0 0
        %1134 = vmatpush1.bf16.msra.mxu0 0
        %1135 = vmatprep.subr.bf16.mxu0 0
        %1136 = vmatpush1.bf16.msra.mxu0 0
        %1137 = vmatprep.subr.bf16.mxu0 0
        %1138 = vmatpush1.bf16.msra.mxu0 0
        %1139 = vmatprep.subr.bf16.mxu0 0
        %1140 = vmatpush1.bf16.msra.mxu0 0
        %1141 = vmatprep.subr.bf16.mxu0 0
        %1142 = vmatpush1.bf16.msra.mxu0 0
        %1143 = vmatprep.subr.bf16.mxu0 0
        %1144 = vmatpush1.bf16.msra.mxu0 0
        %1145 = vmatprep.subr.bf16.mxu0 0
        %1146 = vmatpush1.bf16.msra.mxu0 0
        %1147 = vmatprep.subr.bf16.mxu0 0
        %1148 = vmatpush1.bf16.msra.mxu0 0
        %1149 = vmatprep.mubr.bf16.mxu0 0
        %1150 = vmatmul.mubr.bf16.gmra.mrb[0].mxu0 %v1115
        %v1151 = vpop.f32.mrb[0].mxu0
        %v1152 = vadd.f32 %v1085, %v1151
        %v1153 = vpop.f32.mrb[0].mxu0
        %v1154 = vpop.f32.mrb[0].mxu0
        %v1155 = vpop.f32.mrb[0].mxu0
        %1156 = vdwg.mxu0
        %v1161 = vunpack.c.l.b16 %v1062
        %v1162 = vunpack.c.l.b16 %v1063
        %v1163 = vunpack.c.l.b16 %v1064
        %v1164 = vunpack.c.l.b16 %v1065
        %v1165 = vpack.c.b16 %v1162, %v1161
        %v1166 = vpack.c.b16 %v1164, %v1163
        %1169 = vmatprep.subr.bf16.mxu0 0
        %1170 = vmatpush1.bf16.msra.mxu0 %v1165
        %1171 = vmatprep.subr.bf16.mxu0 0
        %1172 = vmatpush1.bf16.msra.mxu0 %v1166
        %1173 = vmatprep.subr.bf16.mxu0 0
        %1174 = vmatpush1.bf16.msra.mxu0 0
        %1175 = vmatprep.subr.bf16.mxu0 0
        %1176 = vmatpush1.bf16.msra.mxu0 0
        %1177 = vmatprep.subr.bf16.mxu0 0
        %1178 = vmatpush1.bf16.msra.mxu0 0
        %1179 = vmatprep.subr.bf16.mxu0 0
        %1180 = vmatpush1.bf16.msra.mxu0 0
        %1181 = vmatprep.subr.bf16.mxu0 0
        %1182 = vmatpush1.bf16.msra.mxu0 0
        %1183 = vmatprep.subr.bf16.mxu0 0
        %1184 = vmatpush1.bf16.msra.mxu0 0
        %1185 = vmatprep.subr.bf16.mxu0 0
        %1186 = vmatpush1.bf16.msra.mxu0 0
        %1187 = vmatprep.subr.bf16.mxu0 0
        %1188 = vmatpush1.bf16.msra.mxu0 0
        %1189 = vmatprep.subr.bf16.mxu0 0
        %1190 = vmatpush1.bf16.msra.mxu0 0
        %1191 = vmatprep.subr.bf16.mxu0 0
        %1192 = vmatpush1.bf16.msra.mxu0 0
        %1193 = vmatprep.subr.bf16.mxu0 0
        %1194 = vmatpush1.bf16.msra.mxu0 0
        %1195 = vmatprep.subr.bf16.mxu0 0
        %1196 = vmatpush1.bf16.msra.mxu0 0
        %1197 = vmatprep.subr.bf16.mxu0 0
        %1198 = vmatpush1.bf16.msra.mxu0 0
        %1199 = vmatprep.subr.bf16.mxu0 0
        %1200 = vmatpush1.bf16.msra.mxu0 0
        %1201 = vmatprep.mubr.bf16.mxu0 0
        %1202 = vmatmul.mubr.bf16.gmra.mrb[0].mxu0 %v1115
        %v1203 = vpop.f32.mrb[0].mxu0
        %v1204 = vadd.f32 %v1089, %v1203
        %v1205 = vpop.f32.mrb[0].mxu0
        %v1206 = vpop.f32.mrb[0].mxu0
        %v1207 = vpop.f32.mrb[0].mxu0
        %1208 = vdwg.mxu0
        %v1213 = vunpack.c.l.b16 %v1066
        %v1214 = vunpack.c.l.b16 %v1067
        %v1215 = vunpack.c.l.b16 %v1068
        %v1216 = vunpack.c.l.b16 %v1069
        %v1217 = vpack.c.b16 %v1214, %v1213
        %v1218 = vpack.c.b16 %v1216, %v1215
        %1221 = vmatprep.subr.bf16.mxu0 0
        %1222 = vmatpush1.bf16.msra.mxu0 %v1217
        %1223 = vmatprep.subr.bf16.mxu0 0
        %1224 = vmatpush1.bf16.msra.mxu0 %v1218
        %1225 = vmatprep.subr.bf16.mxu0 0
        %1226 = vmatpush1.bf16.msra.mxu0 0
        %1227 = vmatprep.subr.bf16.mxu0 0
        %1228 = vmatpush1.bf16.msra.mxu0 0
        %1229 = vmatprep.subr.bf16.mxu0 0
        %1230 = vmatpush1.bf16.msra.mxu0 0
        %1231 = vmatprep.subr.bf16.mxu0 0
        %1232 = vmatpush1.bf16.msra.mxu0 0
        %1233 = vmatprep.subr.bf16.mxu0 0
        %1234 = vmatpush1.bf16.msra.mxu0 0
        %1235 = vmatprep.subr.bf16.mxu0 0
        %1236 = vmatpush1.bf16.msra.mxu0 0
        %1237 = vmatprep.subr.bf16.mxu0 0
        %1238 = vmatpush1.bf16.msra.mxu0 0
        %1239 = vmatprep.subr.bf16.mxu0 0
        %1240 = vmatpush1.bf16.msra.mxu0 0
        %1241 = vmatprep.subr.bf16.mxu0 0
        %1242 = vmatpush1.bf16.msra.mxu0 0
        %1243 = vmatprep.subr.bf16.mxu0 0
        %1244 = vmatpush1.bf16.msra.mxu0 0
        %1245 = vmatprep.subr.bf16.mxu0 0
        %1246 = vmatpush1.bf16.msra.mxu0 0
        %1247 = vmatprep.subr.bf16.mxu0 0
        %1248 = vmatpush1.bf16.msra.mxu0 0
        %1249 = vmatprep.subr.bf16.mxu0 0
        %1250 = vmatpush1.bf16.msra.mxu0 0
        %1251 = vmatprep.subr.bf16.mxu0 0
        %1252 = vmatpush1.bf16.msra.mxu0 0
        %1253 = vmatprep.mubr.bf16.mxu0 0
        %1254 = vmatmul.mubr.bf16.gmra.mrb[0].mxu0 %v1115
        %v1255 = vpop.f32.mrb[0].mxu0
        %v1256 = vadd.f32 %v1093, %v1255
        %v1257 = vpop.f32.mrb[0].mxu0
        %v1258 = vpop.f32.mrb[0].mxu0
        %v1259 = vpop.f32.mrb[0].mxu0
        %1260 = vdwg.mxu0
        %v1265 = vunpack.c.l.b16 %v1070
        %v1266 = vunpack.c.l.b16 %v1071
        %v1267 = vunpack.c.l.b16 %v1072
        %v1268 = vunpack.c.l.b16 %v1073
        %v1269 = vpack.c.b16 %v1266, %v1265
        %v1270 = vpack.c.b16 %v1268, %v1267
        %1273 = vmatprep.subr.bf16.mxu0 0
        %1274 = vmatpush1.bf16.msra.mxu0 %v1269
        %1275 = vmatprep.subr.bf16.mxu0 0
        %1276 = vmatpush1.bf16.msra.mxu0 %v1270
        %1277 = vmatprep.subr.bf16.mxu0 0
        %1278 = vmatpush1.bf16.msra.mxu0 0
        %1279 = vmatprep.subr.bf16.mxu0 0
        %1280 = vmatpush1.bf16.msra.mxu0 0
        %1281 = vmatprep.subr.bf16.mxu0 0
        %1282 = vmatpush1.bf16.msra.mxu0 0
        %1283 = vmatprep.subr.bf16.mxu0 0
        %1284 = vmatpush1.bf16.msra.mxu0 0
        %1285 = vmatprep.subr.bf16.mxu0 0
        %1286 = vmatpush1.bf16.msra.mxu0 0
        %1287 = vmatprep.subr.bf16.mxu0 0
        %1288 = vmatpush1.bf16.msra.mxu0 0
        %1289 = vmatprep.subr.bf16.mxu0 0
        %1290 = vmatpush1.bf16.msra.mxu0 0
        %1291 = vmatprep.subr.bf16.mxu0 0
        %1292 = vmatpush1.bf16.msra.mxu0 0
        %1293 = vmatprep.subr.bf16.mxu0 0
        %1294 = vmatpush1.bf16.msra.mxu0 0
        %1295 = vmatprep.subr.bf16.mxu0 0
        %1296 = vmatpush1.bf16.msra.mxu0 0
        %1297 = vmatprep.subr.bf16.mxu0 0
        %1298 = vmatpush1.bf16.msra.mxu0 0
        %1299 = vmatprep.subr.bf16.mxu0 0
        %1300 = vmatpush1.bf16.msra.mxu0 0
        %1301 = vmatprep.subr.bf16.mxu0 0
        %1302 = vmatpush1.bf16.msra.mxu0 0
        %1303 = vmatprep.subr.bf16.mxu0 0
        %1304 = vmatpush1.bf16.msra.mxu0 0
        %1305 = vmatprep.mubr.bf16.mxu0 0
        %1306 = vmatmul.mubr.bf16.gmra.mrb[0].mxu0 %v1115
        %v1307 = vpop.f32.mrb[0].mxu0
        %v1308 = vadd.f32 %v1097, %v1307
        %v1309 = vpop.f32.mrb[0].mxu0
        %v1310 = vpop.f32.mrb[0].mxu0
        %v1311 = vpop.f32.mrb[0].mxu0
        %1312 = vdwg.mxu0
        %v1313 = vpack.c.bf16 %v1152, %v1152
        %v1314 = vpack.c.bf16 %v1204, %v1204
        %v1315 = vpack.c.bf16 %v1256, %v1256
        %v1316 = vpack.c.bf16 %v1308, %v1308
        %v1317 = vld [vmem:[%s11] sm:$0x1]
        %v1318 = vld [vmem:[%s11 + $0x1] sm:$0x1]
        %v1319 = vld [vmem:[%s11 + $0x2] sm:$0x1]
        %v1320 = vld [vmem:[%s11 + $0x3] sm:$0x1]
        %v1325 = vlaneseq
        %v1326 = vshrl.u32 %v1325, 7
        %v1327 = vsub.s32 0, %v1326
        %v1328 = vrot.slane %v1317, %v1327
        %v1329 = vlaneseq
        %v1330 = vshrl.u32 %v1329, 7
        %v1331 = vsub.s32 0, %v1330
        %v1332 = vrot.slane %v1318, %v1331
        %v1333 = vlaneseq
        %v1334 = vshrl.u32 %v1333, 7
        %v1335 = vsub.s32 0, %v1334
        %v1336 = vrot.slane %v1319, %v1335
        %v1337 = vlaneseq
        %v1338 = vshrl.u32 %v1337, 7
        %v1339 = vsub.s32 0, %v1338
        %v1340 = vrot.slane %v1320, %v1339
        %v1345 = vadd.f32 %v638, %v1328
        %v1346 = vadd.f32 %v690, %v1332
        %v1347 = vadd.f32 %v742, %v1336
        %v1348 = vadd.f32 %v794, %v1340
        %v1349 = vpack.c.bf16 %v1345, %v1345
        %v1350 = vpack.c.bf16 %v1346, %v1346
        %v1351 = vpack.c.bf16 %v1347, %v1347
        %v1352 = vpack.c.bf16 %v1348, %v1348
        %v1353 = vld [vmem:[%s12] sm:$0x1]
        %v1354 = vld [vmem:[%s12 + $0x1] sm:$0x1]
        %v1355 = vld [vmem:[%s12 + $0x2] sm:$0x1]
        %v1356 = vld [vmem:[%s12 + $0x3] sm:$0x1]
        %v1361 = vlaneseq
        %v1362 = vshrl.u32 %v1361, 7
        %v1363 = vsub.s32 0, %v1362
        %v1364 = vrot.slane %v1353, %v1363
        %v1365 = vlaneseq
        %v1366 = vshrl.u32 %v1365, 7
        %v1367 = vsub.s32 0, %v1366
        %v1368 = vrot.slane %v1354, %v1367
        %v1369 = vlaneseq
        %v1370 = vshrl.u32 %v1369, 7
        %v1371 = vsub.s32 0, %v1370
        %v1372 = vrot.slane %v1355, %v1371
        %v1373 = vlaneseq
        %v1374 = vshrl.u32 %v1373, 7
        %v1375 = vsub.s32 0, %v1374
        %v1376 = vrot.slane %v1356, %v1375
        %v1381 = vadd.f32 %v638, %v1364
        %v1382 = vadd.f32 %v690, %v1368
        %v1383 = vadd.f32 %v742, %v1372
        %v1384 = vadd.f32 %v794, %v1376
        %v1385 = vpack.c.bf16 %v1381, %v1381
        %v1386 = vpack.c.bf16 %v1382, %v1382
        %v1387 = vpack.c.bf16 %v1383, %v1383
        %v1388 = vpack.c.bf16 %v1384, %v1384
        %v1389 = vlaneseq
        %v1390 = vshrl.u32 %v1389, 7
        %v1391 = vsub.s32 7, %v1390
        %v1392 = vld [vmem:[%s4] sm:$0xf]
        %v1393 = vld [vmem:[%s4 + $0x4] sm:$0xf]
        %v1394 = vld [vmem:[%s4 + $0x8] sm:$0xf]
        %v1395 = vld [vmem:[%s4 + $0xc] sm:$0xf]
        %v1396 = vld [vmem:[%s4 + $0x10] sm:$0xf]
        %v1397 = vld [vmem:[%s4 + $0x14] sm:$0xf]
        %v1398 = vld [vmem:[%s4 + $0x18] sm:$0xf]
        %v1399 = vld [vmem:[%s4 + $0x1c] sm:$0xf]
        %v1402 = vunpack.c.l.b16 %v1392
        %v1403 = vunpack.c.l.b16 %v1393
        %v1404 = vpack.c.b16 %v1403, %v1402
        %vm1405 = vcmask 64512
        %v1407 = vsel %vm1405, %v1385, 0
        %v1410 = vsel %vm1405, %v1404, 0
        %1412 = vmatprep.subr.bf16.mxu0 0
        %1413 = vmatpush1.bf16.xpose.msra.mxu0 %v1410
        %1414 = vmatprep.subr.bf16.mxu0 0
        %1415 = vmatpush1.bf16.xpose.msra.mxu0 0
        %1416 = vmatprep.subr.bf16.mxu0 0
        %1417 = vmatpush1.bf16.xpose.msra.mxu0 0
        %1418 = vmatprep.subr.bf16.mxu0 0
        %1419 = vmatpush1.bf16.xpose.msra.mxu0 0
        %1420 = vmatprep.subr.bf16.mxu0 0
        %1421 = vmatpush1.bf16.xpose.msra.mxu0 0
        %1422 = vmatprep.subr.bf16.mxu0 0
        %1423 = vmatpush1.bf16.xpose.msra.mxu0 0
        %1424 = vmatprep.subr.bf16.mxu0 0
        %1425 = vmatpush1.bf16.xpose.msra.mxu0 0
        %1426 = vmatprep.subr.bf16.mxu0 0
        %1427 = vmatpush1.bf16.xpose.msra.mxu0 0
        %1428 = vmatprep.subr.bf16.mxu0 0
        %1429 = vmatpush1.bf16.xpose.msra.mxu0 0
        %1430 = vmatprep.subr.bf16.mxu0 0
        %1431 = vmatpush1.bf16.xpose.msra.mxu0 0
        %1432 = vmatprep.subr.bf16.mxu0 0
        %1433 = vmatpush1.bf16.xpose.msra.mxu0 0
        %1434 = vmatprep.subr.bf16.mxu0 0
        %1435 = vmatpush1.bf16.xpose.msra.mxu0 0
        %1436 = vmatprep.subr.bf16.mxu0 0
        %1437 = vmatpush1.bf16.xpose.msra.mxu0 0
        %1438 = vmatprep.subr.bf16.mxu0 0
        %1439 = vmatpush1.bf16.xpose.msra.mxu0 0
        %1440 = vmatprep.subr.bf16.mxu0 0
        %1441 = vmatpush1.bf16.xpose.msra.mxu0 0
        %1442 = vmatprep.subr.bf16.mxu0 0
        %1443 = vmatpush1.bf16.xpose.msra.mxu0 0
        %1444 = vmatprep.mubr.bf16.mxu0 0
        %1445 = vmatmul.mubr.bf16.gmra.mrb[0].mxu0 %v1407
        %v1446 = vpop.f32.mrb[0].mxu0
        %v1447 = vadd.f32 0.0, %v1446
        %v1448 = vpop.f32.mrb[0].mxu0
        %v1449 = vpop.f32.mrb[0].mxu0
        %v1450 = vpop.f32.mrb[0].mxu0
        %1451 = vdwg.mxu0
        %v1454 = vunpack.c.l.b16 %v1394
        %v1455 = vunpack.c.l.b16 %v1395
        %v1456 = vpack.c.b16 %v1455, %v1454
        %v1458 = vsel %vm1405, %v1386, 0
        %v1461 = vsel %vm1405, %v1456, 0
        %1463 = vmatprep.subr.bf16.mxu0 0
        %1464 = vmatpush1.bf16.xpose.msra.mxu0 %v1461
        %1465 = vmatprep.subr.bf16.mxu0 0
        %1466 = vmatpush1.bf16.xpose.msra.mxu0 0
        %1467 = vmatprep.subr.bf16.mxu0 0
        %1468 = vmatpush1.bf16.xpose.msra.mxu0 0
        %1469 = vmatprep.subr.bf16.mxu0 0
        %1470 = vmatpush1.bf16.xpose.msra.mxu0 0
        %1471 = vmatprep.subr.bf16.mxu0 0
        %1472 = vmatpush1.bf16.xpose.msra.mxu0 0
        %1473 = vmatprep.subr.bf16.mxu0 0
        %1474 = vmatpush1.bf16.xpose.msra.mxu0 0
        %1475 = vmatprep.subr.bf16.mxu0 0
        %1476 = vmatpush1.bf16.xpose.msra.mxu0 0
        %1477 = vmatprep.subr.bf16.mxu0 0
        %1478 = vmatpush1.bf16.xpose.msra.mxu0 0
        %1479 = vmatprep.subr.bf16.mxu0 0
        %1480 = vmatpush1.bf16.xpose.msra.mxu0 0
        %1481 = vmatprep.subr.bf16.mxu0 0
        %1482 = vmatpush1.bf16.xpose.msra.mxu0 0
        %1483 = vmatprep.subr.bf16.mxu0 0
        %1484 = vmatpush1.bf16.xpose.msra.mxu0 0
        %1485 = vmatprep.subr.bf16.mxu0 0
        %1486 = vmatpush1.bf16.xpose.msra.mxu0 0
        %1487 = vmatprep.subr.bf16.mxu0 0
        %1488 = vmatpush1.bf16.xpose.msra.mxu0 0
        %1489 = vmatprep.subr.bf16.mxu0 0
        %1490 = vmatpush1.bf16.xpose.msra.mxu0 0
        %1491 = vmatprep.subr.bf16.mxu0 0
        %1492 = vmatpush1.bf16.xpose.msra.mxu0 0
        %1493 = vmatprep.subr.bf16.mxu0 0
        %1494 = vmatpush1.bf16.xpose.msra.mxu0 0
        %1495 = vmatprep.mubr.bf16.mxu0 0
        %1496 = vmatmul.mubr.bf16.gmra.mrb[0].mxu0 %v1458
        %v1497 = vpop.f32.mrb[0].mxu0
        %v1498 = vadd.f32 0.0, %v1497
        %v1499 = vpop.f32.mrb[0].mxu0
        %v1500 = vpop.f32.mrb[0].mxu0
        %v1501 = vpop.f32.mrb[0].mxu0
        %1502 = vdwg.mxu0
        %v1505 = vunpack.c.l.b16 %v1396
        %v1506 = vunpack.c.l.b16 %v1397
        %v1507 = vpack.c.b16 %v1506, %v1505
        %v1509 = vsel %vm1405, %v1387, 0
        %v1512 = vsel %vm1405, %v1507, 0
        %1514 = vmatprep.subr.bf16.mxu0 0
        %1515 = vmatpush1.bf16.xpose.msra.mxu0 %v1512
        %1516 = vmatprep.subr.bf16.mxu0 0
        %1517 = vmatpush1.bf16.xpose.msra.mxu0 0
        %1518 = vmatprep.subr.bf16.mxu0 0
        %1519 = vmatpush1.bf16.xpose.msra.mxu0 0
        %1520 = vmatprep.subr.bf16.mxu0 0
        %1521 = vmatpush1.bf16.xpose.msra.mxu0 0
        %1522 = vmatprep.subr.bf16.mxu0 0
        %1523 = vmatpush1.bf16.xpose.msra.mxu0 0
        %1524 = vmatprep.subr.bf16.mxu0 0
        %1525 = vmatpush1.bf16.xpose.msra.mxu0 0
        %1526 = vmatprep.subr.bf16.mxu0 0
        %1527 = vmatpush1.bf16.xpose.msra.mxu0 0
        %1528 = vmatprep.subr.bf16.mxu0 0
        %1529 = vmatpush1.bf16.xpose.msra.mxu0 0
        %1530 = vmatprep.subr.bf16.mxu0 0
        %1531 = vmatpush1.bf16.xpose.msra.mxu0 0
        %1532 = vmatprep.subr.bf16.mxu0 0
        %1533 = vmatpush1.bf16.xpose.msra.mxu0 0
        %1534 = vmatprep.subr.bf16.mxu0 0
        %1535 = vmatpush1.bf16.xpose.msra.mxu0 0
        %1536 = vmatprep.subr.bf16.mxu0 0
        %1537 = vmatpush1.bf16.xpose.msra.mxu0 0
        %1538 = vmatprep.subr.bf16.mxu0 0
        %1539 = vmatpush1.bf16.xpose.msra.mxu0 0
        %1540 = vmatprep.subr.bf16.mxu0 0
        %1541 = vmatpush1.bf16.xpose.msra.mxu0 0
        %1542 = vmatprep.subr.bf16.mxu0 0
        %1543 = vmatpush1.bf16.xpose.msra.mxu0 0
        %1544 = vmatprep.subr.bf16.mxu0 0
        %1545 = vmatpush1.bf16.xpose.msra.mxu0 0
        %1546 = vmatprep.mubr.bf16.mxu0 0
        %1547 = vmatmul.mubr.bf16.gmra.mrb[0].mxu0 %v1509
        %v1548 = vpop.f32.mrb[0].mxu0
        %v1549 = vadd.f32 0.0, %v1548
        %v1550 = vpop.f32.mrb[0].mxu0
        %v1551 = vpop.f32.mrb[0].mxu0
        %v1552 = vpop.f32.mrb[0].mxu0
        %1553 = vdwg.mxu0
        %v1556 = vunpack.c.l.b16 %v1398
        %v1557 = vunpack.c.l.b16 %v1399
        %v1558 = vpack.c.b16 %v1557, %v1556
        %v1560 = vsel %vm1405, %v1388, 0
        %v1563 = vsel %vm1405, %v1558, 0
        %1565 = vmatprep.subr.bf16.mxu0 0
        %1566 = vmatpush1.bf16.xpose.msra.mxu0 %v1563
        %1567 = vmatprep.subr.bf16.mxu0 0
        %1568 = vmatpush1.bf16.xpose.msra.mxu0 0
        %1569 = vmatprep.subr.bf16.mxu0 0
        %1570 = vmatpush1.bf16.xpose.msra.mxu0 0
        %1571 = vmatprep.subr.bf16.mxu0 0
        %1572 = vmatpush1.bf16.xpose.msra.mxu0 0
        %1573 = vmatprep.subr.bf16.mxu0 0
        %1574 = vmatpush1.bf16.xpose.msra.mxu0 0
        %1575 = vmatprep.subr.bf16.mxu0 0
        %1576 = vmatpush1.bf16.xpose.msra.mxu0 0
        %1577 = vmatprep.subr.bf16.mxu0 0
        %1578 = vmatpush1.bf16.xpose.msra.mxu0 0
        %1579 = vmatprep.subr.bf16.mxu0 0
        %1580 = vmatpush1.bf16.xpose.msra.mxu0 0
        %1581 = vmatprep.subr.bf16.mxu0 0
        %1582 = vmatpush1.bf16.xpose.msra.mxu0 0
        %1583 = vmatprep.subr.bf16.mxu0 0
        %1584 = vmatpush1.bf16.xpose.msra.mxu0 0
        %1585 = vmatprep.subr.bf16.mxu0 0
        %1586 = vmatpush1.bf16.xpose.msra.mxu0 0
        %1587 = vmatprep.subr.bf16.mxu0 0
        %1588 = vmatpush1.bf16.xpose.msra.mxu0 0
        %1589 = vmatprep.subr.bf16.mxu0 0
        %1590 = vmatpush1.bf16.xpose.msra.mxu0 0
        %1591 = vmatprep.subr.bf16.mxu0 0
        %1592 = vmatpush1.bf16.xpose.msra.mxu0 0
        %1593 = vmatprep.subr.bf16.mxu0 0
        %1594 = vmatpush1.bf16.xpose.msra.mxu0 0
        %1595 = vmatprep.subr.bf16.mxu0 0
        %1596 = vmatpush1.bf16.xpose.msra.mxu0 0
        %1597 = vmatprep.mubr.bf16.mxu0 0
        %1598 = vmatmul.mubr.bf16.gmra.mrb[0].mxu0 %v1560
        %v1599 = vpop.f32.mrb[0].mxu0
        %v1600 = vadd.f32 0.0, %v1599
        %v1601 = vpop.f32.mrb[0].mxu0
        %v1602 = vpop.f32.mrb[0].mxu0
        %v1603 = vpop.f32.mrb[0].mxu0
        %1604 = vdwg.mxu0
        %1609 = vrot.lane.b32.xlu0 %v1447, 127
        %v1610 = vpop.permute.xlu0 %1609
        %1611 = vrot.lane.b32.xlu0 %v1498, 127
        %v1612 = vpop.permute.xlu0 %1611
        %1613 = vrot.lane.b32.xlu0 %v1549, 127
        %v1614 = vpop.permute.xlu0 %1613
        %1615 = vrot.lane.b32.xlu0 %v1600, 127
        %v1616 = vpop.permute.xlu0 %1615
        %1621 = vrot.lane.b32.xlu0 %v1447, 15
        %v1622 = vpop.permute.xlu0 %1621
        %1623 = vrot.lane.b32.xlu0 %v1498, 15
        %v1624 = vpop.permute.xlu0 %1623
        %1625 = vrot.lane.b32.xlu0 %v1549, 15
        %v1626 = vpop.permute.xlu0 %1625
        %1627 = vrot.lane.b32.xlu0 %v1600, 15
        %v1628 = vpop.permute.xlu0 %1627
        %vm1633 = vcmask 121856
        %v1634 = vsel %vm1633, %v1610, %v1622
        %v1635 = vsel %vm1633, %v1612, %v1624
        %v1636 = vsel %vm1633, %v1614, %v1626
        %v1637 = vsel %vm1633, %v1616, %v1628
        %v1638 = vand.u32 %v1391, 1
        %vm1639 = vcmp.eq.s32.totalorder %v1638, 1
        %v1640 = vsel %vm1639, 1, 0
        %vm1641 = vcmp.eq.s32.totalorder %v1640, 1
        %v1642 = vsel %vm1641, %v1634, %v1447
        %v1643 = vsel %vm1641, %v1635, %v1498
        %v1644 = vsel %vm1641, %v1636, %v1549
        %v1645 = vsel %vm1641, %v1637, %v1600
        %1650 = vrot.lane.b32.xlu0 %v1642, 126
        %v1651 = vpop.permute.xlu0 %1650
        %1652 = vrot.lane.b32.xlu0 %v1643, 126
        %v1653 = vpop.permute.xlu0 %1652
        %1654 = vrot.lane.b32.xlu0 %v1644, 126
        %v1655 = vpop.permute.xlu0 %1654
        %1656 = vrot.lane.b32.xlu0 %v1645, 126
        %v1657 = vpop.permute.xlu0 %1656
        %1662 = vrot.lane.b32.xlu0 %v1642, 14
        %v1663 = vpop.permute.xlu0 %1662
        %1664 = vrot.lane.b32.xlu0 %v1643, 14
        %v1665 = vpop.permute.xlu0 %1664
        %1666 = vrot.lane.b32.xlu0 %v1644, 14
        %v1667 = vpop.permute.xlu0 %1666
        %1668 = vrot.lane.b32.xlu0 %v1645, 14
        %v1669 = vpop.permute.xlu0 %1668
        %vm1674 = vcmask 113664
        %v1675 = vsel %vm1674, %v1651, %v1663
        %v1676 = vsel %vm1674, %v1653, %v1665
        %v1677 = vsel %vm1674, %v1655, %v1667
        %v1678 = vsel %vm1674, %v1657, %v1669
        %v1679 = vshra.s32 %v1391, 1
        %v1680 = vand.u32 %v1679, 1
        %vm1681 = vcmp.eq.s32.totalorder %v1680, 1
        %v1682 = vsel %vm1681, 1, 0
        %vm1683 = vcmp.eq.s32.totalorder %v1682, 1
        %v1684 = vsel %vm1683, %v1675, %v1642
        %v1685 = vsel %vm1683, %v1676, %v1643
        %v1686 = vsel %vm1683, %v1677, %v1644
        %v1687 = vsel %vm1683, %v1678, %v1645
        %1692 = vrot.lane.b32.xlu0 %v1684, 124
        %v1693 = vpop.permute.xlu0 %1692
        %1694 = vrot.lane.b32.xlu0 %v1685, 124
        %v1695 = vpop.permute.xlu0 %1694
        %1696 = vrot.lane.b32.xlu0 %v1686, 124
        %v1697 = vpop.permute.xlu0 %1696
        %1698 = vrot.lane.b32.xlu0 %v1687, 124
        %v1699 = vpop.permute.xlu0 %1698
        %1704 = vrot.lane.b32.xlu0 %v1684, 12
        %v1705 = vpop.permute.xlu0 %1704
        %1706 = vrot.lane.b32.xlu0 %v1685, 12
        %v1707 = vpop.permute.xlu0 %1706
        %1708 = vrot.lane.b32.xlu0 %v1686, 12
        %v1709 = vpop.permute.xlu0 %1708
        %1710 = vrot.lane.b32.xlu0 %v1687, 12
        %v1711 = vpop.permute.xlu0 %1710
        %vm1716 = vcmask 97280
        %v1717 = vsel %vm1716, %v1693, %v1705
        %v1718 = vsel %vm1716, %v1695, %v1707
        %v1719 = vsel %vm1716, %v1697, %v1709
        %v1720 = vsel %vm1716, %v1699, %v1711
        %v1721 = vshra.s32 %v1391, 2
        %v1722 = vand.u32 %v1721, 1
        %vm1723 = vcmp.eq.s32.totalorder %v1722, 1
        %v1724 = vsel %vm1723, 1, 0
        %vm1725 = vcmp.eq.s32.totalorder %v1724, 1
        %v1726 = vsel %vm1725, %v1717, %v1684
        %v1727 = vsel %vm1725, %v1718, %v1685
        %v1728 = vsel %vm1725, %v1719, %v1686
        %v1729 = vsel %vm1725, %v1720, %v1687
        %vm1730 = vcmp.ne.s32.totalorder %v542, 0
        %v1732 = vsel %vm1405, %v1349, 0
        %v1735 = vsel %vm1405, %v1054, 0
        %1737 = vmatprep.subr.bf16.mxu0 0
        %1738 = vmatpush1.bf16.xpose.msra.mxu0 %v1735
        %1739 = vmatprep.subr.bf16.mxu0 0
        %1740 = vmatpush1.bf16.xpose.msra.mxu0 0
        %1741 = vmatprep.subr.bf16.mxu0 0
        %1742 = vmatpush1.bf16.xpose.msra.mxu0 0
        %1743 = vmatprep.subr.bf16.mxu0 0
        %1744 = vmatpush1.bf16.xpose.msra.mxu0 0
        %1745 = vmatprep.subr.bf16.mxu0 0
        %1746 = vmatpush1.bf16.xpose.msra.mxu0 0
        %1747 = vmatprep.subr.bf16.mxu0 0
        %1748 = vmatpush1.bf16.xpose.msra.mxu0 0
        %1749 = vmatprep.subr.bf16.mxu0 0
        %1750 = vmatpush1.bf16.xpose.msra.mxu0 0
        %1751 = vmatprep.subr.bf16.mxu0 0
        %1752 = vmatpush1.bf16.xpose.msra.mxu0 0
        %1753 = vmatprep.subr.bf16.mxu0 0
        %1754 = vmatpush1.bf16.xpose.msra.mxu0 0
        %1755 = vmatprep.subr.bf16.mxu0 0
        %1756 = vmatpush1.bf16.xpose.msra.mxu0 0
        %1757 = vmatprep.subr.bf16.mxu0 0
        %1758 = vmatpush1.bf16.xpose.msra.mxu0 0
        %1759 = vmatprep.subr.bf16.mxu0 0
        %1760 = vmatpush1.bf16.xpose.msra.mxu0 0
        %1761 = vmatprep.subr.bf16.mxu0 0
        %1762 = vmatpush1.bf16.xpose.msra.mxu0 0
        %1763 = vmatprep.subr.bf16.mxu0 0
        %1764 = vmatpush1.bf16.xpose.msra.mxu0 0
        %1765 = vmatprep.subr.bf16.mxu0 0
        %1766 = vmatpush1.bf16.xpose.msra.mxu0 0
        %1767 = vmatprep.subr.bf16.mxu0 0
        %1768 = vmatpush1.bf16.xpose.msra.mxu0 0
        %1769 = vmatprep.mubr.bf16.mxu0 0
        %1770 = vmatmul.mubr.bf16.gmra.mrb[0].mxu0 %v1732
        %v1771 = vpop.f32.mrb[0].mxu0
        %v1772 = vadd.f32 %v1726, %v1771
        %v1773 = vpop.f32.mrb[0].mxu0
        %v1774 = vpop.f32.mrb[0].mxu0
        %v1775 = vpop.f32.mrb[0].mxu0
        %1776 = vdwg.mxu0
        %v1778 = vsel %vm1405, %v1350, 0
        %v1781 = vsel %vm1405, %v1055, 0
        %1783 = vmatprep.subr.bf16.mxu0 0
        %1784 = vmatpush1.bf16.xpose.msra.mxu0 %v1781
        %1785 = vmatprep.subr.bf16.mxu0 0
        %1786 = vmatpush1.bf16.xpose.msra.mxu0 0
        %1787 = vmatprep.subr.bf16.mxu0 0
        %1788 = vmatpush1.bf16.xpose.msra.mxu0 0
        %1789 = vmatprep.subr.bf16.mxu0 0
        %1790 = vmatpush1.bf16.xpose.msra.mxu0 0
        %1791 = vmatprep.subr.bf16.mxu0 0
        %1792 = vmatpush1.bf16.xpose.msra.mxu0 0
        %1793 = vmatprep.subr.bf16.mxu0 0
        %1794 = vmatpush1.bf16.xpose.msra.mxu0 0
        %1795 = vmatprep.subr.bf16.mxu0 0
        %1796 = vmatpush1.bf16.xpose.msra.mxu0 0
        %1797 = vmatprep.subr.bf16.mxu0 0
        %1798 = vmatpush1.bf16.xpose.msra.mxu0 0
        %1799 = vmatprep.subr.bf16.mxu0 0
        %1800 = vmatpush1.bf16.xpose.msra.mxu0 0
        %1801 = vmatprep.subr.bf16.mxu0 0
        %1802 = vmatpush1.bf16.xpose.msra.mxu0 0
        %1803 = vmatprep.subr.bf16.mxu0 0
        %1804 = vmatpush1.bf16.xpose.msra.mxu0 0
        %1805 = vmatprep.subr.bf16.mxu0 0
        %1806 = vmatpush1.bf16.xpose.msra.mxu0 0
        %1807 = vmatprep.subr.bf16.mxu0 0
        %1808 = vmatpush1.bf16.xpose.msra.mxu0 0
        %1809 = vmatprep.subr.bf16.mxu0 0
        %1810 = vmatpush1.bf16.xpose.msra.mxu0 0
        %1811 = vmatprep.subr.bf16.mxu0 0
        %1812 = vmatpush1.bf16.xpose.msra.mxu0 0
        %1813 = vmatprep.subr.bf16.mxu0 0
        %1814 = vmatpush1.bf16.xpose.msra.mxu0 0
        %1815 = vmatprep.mubr.bf16.mxu0 0
        %1816 = vmatmul.mubr.bf16.gmra.mrb[0].mxu0 %v1778
        %v1817 = vpop.f32.mrb[0].mxu0
        %v1818 = vadd.f32 %v1727, %v1817
        %v1819 = vpop.f32.mrb[0].mxu0
        %v1820 = vpop.f32.mrb[0].mxu0
        %v1821 = vpop.f32.mrb[0].mxu0
        %1822 = vdwg.mxu0
        %v1824 = vsel %vm1405, %v1351, 0
        %v1827 = vsel %vm1405, %v1056, 0
        %1829 = vmatprep.subr.bf16.mxu0 0
        %1830 = vmatpush1.bf16.xpose.msra.mxu0 %v1827
        %1831 = vmatprep.subr.bf16.mxu0 0
        %1832 = vmatpush1.bf16.xpose.msra.mxu0 0
        %1833 = vmatprep.subr.bf16.mxu0 0
        %1834 = vmatpush1.bf16.xpose.msra.mxu0 0
        %1835 = vmatprep.subr.bf16.mxu0 0
        %1836 = vmatpush1.bf16.xpose.msra.mxu0 0
        %1837 = vmatprep.subr.bf16.mxu0 0
        %1838 = vmatpush1.bf16.xpose.msra.mxu0 0
        %1839 = vmatprep.subr.bf16.mxu0 0
        %1840 = vmatpush1.bf16.xpose.msra.mxu0 0
        %1841 = vmatprep.subr.bf16.mxu0 0
        %1842 = vmatpush1.bf16.xpose.msra.mxu0 0
        %1843 = vmatprep.subr.bf16.mxu0 0
        %1844 = vmatpush1.bf16.xpose.msra.mxu0 0
        %1845 = vmatprep.subr.bf16.mxu0 0
        %1846 = vmatpush1.bf16.xpose.msra.mxu0 0
        %1847 = vmatprep.subr.bf16.mxu0 0
        %1848 = vmatpush1.bf16.xpose.msra.mxu0 0
        %1849 = vmatprep.subr.bf16.mxu0 0
        %1850 = vmatpush1.bf16.xpose.msra.mxu0 0
        %1851 = vmatprep.subr.bf16.mxu0 0
        %1852 = vmatpush1.bf16.xpose.msra.mxu0 0
        %1853 = vmatprep.subr.bf16.mxu0 0
        %1854 = vmatpush1.bf16.xpose.msra.mxu0 0
        %1855 = vmatprep.subr.bf16.mxu0 0
        %1856 = vmatpush1.bf16.xpose.msra.mxu0 0
        %1857 = vmatprep.subr.bf16.mxu0 0
        %1858 = vmatpush1.bf16.xpose.msra.mxu0 0
        %1859 = vmatprep.subr.bf16.mxu0 0
        %1860 = vmatpush1.bf16.xpose.msra.mxu0 0
        %1861 = vmatprep.mubr.bf16.mxu0 0
        %1862 = vmatmul.mubr.bf16.gmra.mrb[0].mxu0 %v1824
        %v1863 = vpop.f32.mrb[0].mxu0
        %v1864 = vadd.f32 %v1728, %v1863
        %v1865 = vpop.f32.mrb[0].mxu0
        %v1866 = vpop.f32.mrb[0].mxu0
        %v1867 = vpop.f32.mrb[0].mxu0
        %1868 = vdwg.mxu0
        %v1870 = vsel %vm1405, %v1352, 0
        %v1873 = vsel %vm1405, %v1057, 0
        %1875 = vmatprep.subr.bf16.mxu0 0
        %1876 = vmatpush1.bf16.xpose.msra.mxu0 %v1873
        %1877 = vmatprep.subr.bf16.mxu0 0
        %1878 = vmatpush1.bf16.xpose.msra.mxu0 0
        %1879 = vmatprep.subr.bf16.mxu0 0
        %1880 = vmatpush1.bf16.xpose.msra.mxu0 0
        %1881 = vmatprep.subr.bf16.mxu0 0
        %1882 = vmatpush1.bf16.xpose.msra.mxu0 0
        %1883 = vmatprep.subr.bf16.mxu0 0
        %1884 = vmatpush1.bf16.xpose.msra.mxu0 0
        %1885 = vmatprep.subr.bf16.mxu0 0
        %1886 = vmatpush1.bf16.xpose.msra.mxu0 0
        %1887 = vmatprep.subr.bf16.mxu0 0
        %1888 = vmatpush1.bf16.xpose.msra.mxu0 0
        %1889 = vmatprep.subr.bf16.mxu0 0
        %1890 = vmatpush1.bf16.xpose.msra.mxu0 0
        %1891 = vmatprep.subr.bf16.mxu0 0
        %1892 = vmatpush1.bf16.xpose.msra.mxu0 0
        %1893 = vmatprep.subr.bf16.mxu0 0
        %1894 = vmatpush1.bf16.xpose.msra.mxu0 0
        %1895 = vmatprep.subr.bf16.mxu0 0
        %1896 = vmatpush1.bf16.xpose.msra.mxu0 0
        %1897 = vmatprep.subr.bf16.mxu0 0
        %1898 = vmatpush1.bf16.xpose.msra.mxu0 0
        %1899 = vmatprep.subr.bf16.mxu0 0
        %1900 = vmatpush1.bf16.xpose.msra.mxu0 0
        %1901 = vmatprep.subr.bf16.mxu0 0
        %1902 = vmatpush1.bf16.xpose.msra.mxu0 0
        %1903 = vmatprep.subr.bf16.mxu0 0
        %1904 = vmatpush1.bf16.xpose.msra.mxu0 0
        %1905 = vmatprep.subr.bf16.mxu0 0
        %1906 = vmatpush1.bf16.xpose.msra.mxu0 0
        %1907 = vmatprep.mubr.bf16.mxu0 0
        %1908 = vmatmul.mubr.bf16.gmra.mrb[0].mxu0 %v1870
        %v1909 = vpop.f32.mrb[0].mxu0
        %v1910 = vadd.f32 %v1729, %v1909
        %v1911 = vpop.f32.mrb[0].mxu0
        %v1912 = vpop.f32.mrb[0].mxu0
        %v1913 = vpop.f32.mrb[0].mxu0
        %1914 = vdwg.mxu0
        %v1915 = vsel %vm1730, 1, 0
        %v1916 = vlaneseq
        %v1917 = vshrl.u32 %v1916, 7
        %v1918 = vsub.s32 0, %v1917
        %v1919 = vrot.slane %v1915, %v1918
        %vm1920 = vcmp.eq.s32.totalorder %v1919, 1
        %v1921 = vsel %vm1920, %v1772, -1e+30
        %v1922 = vsel %vm1920, %v1818, -1e+30
        %v1923 = vsel %vm1920, %v1864, -1e+30
        %v1924 = vsel %vm1920, %v1910, -1e+30
        %v1925 = vsel %vm1405, %v1921, -inf
        %1926 = vmax.xlane.f32.xlu0 %v1925
        %v1927 = vpop.xlane.xlu0 %1926
        %v1928 = vsel %vm1405, %v1922, -inf
        %1929 = vmax.xlane.f32.xlu0 %v1928
        %v1930 = vpop.xlane.xlu0 %1929
        %v1931 = vsel %vm1405, %v1923, -inf
        %1932 = vmax.xlane.f32.xlu0 %v1931
        %v1933 = vpop.xlane.xlu0 %1932
        %v1934 = vsel %vm1405, %v1924, -inf
        %1935 = vmax.xlane.f32.xlu0 %v1934
        %v1936 = vpop.xlane.xlu0 %1935
        %v1937 = vsub.f32 -inf, %v1927
        %v1938 = vsub.f32 -inf, %v1930
        %v1939 = vsub.f32 -inf, %v1933
        %v1940 = vsub.f32 -inf, %v1936
        %v1941 = vmul.f32 %v1937, 1.442695
        %v1942 = vpow.pop %v1941
        %v1943 = vmul.f32 %v1938, 1.442695
        %v1944 = vpow.pop %v1943
        %v1945 = vmul.f32 %v1939, 1.442695
        %v1946 = vpow.pop %v1945
        %v1947 = vmul.f32 %v1940, 1.442695
        %v1948 = vpow.pop %v1947
        %v1949 = vsub.f32 %v1921, %v1927
        %v1950 = vsub.f32 %v1922, %v1930
        %v1951 = vsub.f32 %v1923, %v1933
        %v1952 = vsub.f32 %v1924, %v1936
        %v1953 = vmul.f32 %v1949, 1.442695
        %v1954 = vpow.pop %v1953
        %v1955 = vmul.f32 %v1950, 1.442695
        %v1956 = vpow.pop %v1955
        %v1957 = vmul.f32 %v1951, 1.442695
        %v1958 = vpow.pop %v1957
        %v1959 = vmul.f32 %v1952, 1.442695
        %v1960 = vpow.pop %v1959
        %v1961 = vmul.f32 %v1942, 0.0
        %v1962 = vmul.f32 %v1944, 0.0
        %v1963 = vmul.f32 %v1946, 0.0
        %v1964 = vmul.f32 %v1948, 0.0
        %v1965 = vsel %vm1405, %v1954, 0.0
        %1966 = vadd.xlane.f32.xlu0 %v1965
        %v1967 = vpop.xlane.xlu0 %1966
        %v1968 = vsel %vm1405, %v1956, 0.0
        %1969 = vadd.xlane.f32.xlu0 %v1968
        %v1970 = vpop.xlane.xlu0 %1969
        %v1971 = vsel %vm1405, %v1958, 0.0
        %1972 = vadd.xlane.f32.xlu0 %v1971
        %v1973 = vpop.xlane.xlu0 %1972
        %v1974 = vsel %vm1405, %v1960, 0.0
        %1975 = vadd.xlane.f32.xlu0 %v1974
        %v1976 = vpop.xlane.xlu0 %1975
        %v1977 = vadd.f32 %v1961, %v1967
        %v1978 = vadd.f32 %v1962, %v1970
        %v1979 = vadd.f32 %v1963, %v1973
        %v1980 = vadd.f32 %v1964, %v1976
        %v1981 = vpack.c.bf16 %v1954, %v1954
        %v1982 = vpack.c.bf16 %v1956, %v1956
        %v1983 = vpack.c.bf16 %v1958, %v1958
        %v1984 = vpack.c.bf16 %v1960, %v1960
        %v1986 = vsel %vm1405, %v1981, 0
        %vm1988 = vcmask 1043456
        %v1990 = vsel %vm1988, %v1313, 0
        %1992 = vmatprep.subr.bf16.mxu0 0
        %1993 = vmatpush1.bf16.msra.mxu0 %v1990
        %1994 = vmatprep.subr.bf16.mxu0 0
        %1995 = vmatpush1.bf16.msra.mxu0 0
        %1996 = vmatprep.subr.bf16.mxu0 0
        %1997 = vmatpush1.bf16.msra.mxu0 0
        %1998 = vmatprep.subr.bf16.mxu0 0
        %1999 = vmatpush1.bf16.msra.mxu0 0
        %2000 = vmatprep.subr.bf16.mxu0 0
        %2001 = vmatpush1.bf16.msra.mxu0 0
        %2002 = vmatprep.subr.bf16.mxu0 0
        %2003 = vmatpush1.bf16.msra.mxu0 0
        %2004 = vmatprep.subr.bf16.mxu0 0
        %2005 = vmatpush1.bf16.msra.mxu0 0
        %2006 = vmatprep.subr.bf16.mxu0 0
        %2007 = vmatpush1.bf16.msra.mxu0 0
        %2008 = vmatprep.subr.bf16.mxu0 0
        %2009 = vmatpush1.bf16.msra.mxu0 0
        %2010 = vmatprep.subr.bf16.mxu0 0
        %2011 = vmatpush1.bf16.msra.mxu0 0
        %2012 = vmatprep.subr.bf16.mxu0 0
        %2013 = vmatpush1.bf16.msra.mxu0 0
        %2014 = vmatprep.subr.bf16.mxu0 0
        %2015 = vmatpush1.bf16.msra.mxu0 0
        %2016 = vmatprep.subr.bf16.mxu0 0
        %2017 = vmatpush1.bf16.msra.mxu0 0
        %2018 = vmatprep.subr.bf16.mxu0 0
        %2019 = vmatpush1.bf16.msra.mxu0 0
        %2020 = vmatprep.subr.bf16.mxu0 0
        %2021 = vmatpush1.bf16.msra.mxu0 0
        %2022 = vmatprep.subr.bf16.mxu0 0
        %2023 = vmatpush1.bf16.msra.mxu0 0
        %2024 = vmatprep.mubr.bf16.mxu0 0
        %2025 = vmatmul.mubr.bf16.gmra.mrb[0].mxu0 %v1986
        %v2026 = vpop.f32.mrb[0].mxu0
        %v2027 = vadd.f32 0.0, %v2026
        %v2028 = vpop.f32.mrb[0].mxu0
        %v2029 = vpop.f32.mrb[0].mxu0
        %v2030 = vpop.f32.mrb[0].mxu0
        %2031 = vdwg.mxu0
        %v2033 = vsel %vm1405, %v1982, 0
        %v2036 = vsel %vm1988, %v1314, 0
        %2038 = vmatprep.subr.bf16.mxu0 0
        %2039 = vmatpush1.bf16.msra.mxu0 %v2036
        %2040 = vmatprep.subr.bf16.mxu0 0
        %2041 = vmatpush1.bf16.msra.mxu0 0
        %2042 = vmatprep.subr.bf16.mxu0 0
        %2043 = vmatpush1.bf16.msra.mxu0 0
        %2044 = vmatprep.subr.bf16.mxu0 0
        %2045 = vmatpush1.bf16.msra.mxu0 0
        %2046 = vmatprep.subr.bf16.mxu0 0
        %2047 = vmatpush1.bf16.msra.mxu0 0
        %2048 = vmatprep.subr.bf16.mxu0 0
        %2049 = vmatpush1.bf16.msra.mxu0 0
        %2050 = vmatprep.subr.bf16.mxu0 0
        %2051 = vmatpush1.bf16.msra.mxu0 0
        %2052 = vmatprep.subr.bf16.mxu0 0
        %2053 = vmatpush1.bf16.msra.mxu0 0
        %2054 = vmatprep.subr.bf16.mxu0 0
        %2055 = vmatpush1.bf16.msra.mxu0 0
        %2056 = vmatprep.subr.bf16.mxu0 0
        %2057 = vmatpush1.bf16.msra.mxu0 0
        %2058 = vmatprep.subr.bf16.mxu0 0
        %2059 = vmatpush1.bf16.msra.mxu0 0
        %2060 = vmatprep.subr.bf16.mxu0 0
        %2061 = vmatpush1.bf16.msra.mxu0 0
        %2062 = vmatprep.subr.bf16.mxu0 0
        %2063 = vmatpush1.bf16.msra.mxu0 0
        %2064 = vmatprep.subr.bf16.mxu0 0
        %2065 = vmatpush1.bf16.msra.mxu0 0
        %2066 = vmatprep.subr.bf16.mxu0 0
        %2067 = vmatpush1.bf16.msra.mxu0 0
        %2068 = vmatprep.subr.bf16.mxu0 0
        %2069 = vmatpush1.bf16.msra.mxu0 0
        %2070 = vmatprep.mubr.bf16.mxu0 0
        %2071 = vmatmul.mubr.bf16.gmra.mrb[0].mxu0 %v2033
        %v2072 = vpop.f32.mrb[0].mxu0
        %v2073 = vadd.f32 0.0, %v2072
        %v2074 = vpop.f32.mrb[0].mxu0
        %v2075 = vpop.f32.mrb[0].mxu0
        %v2076 = vpop.f32.mrb[0].mxu0
        %2077 = vdwg.mxu0
        %v2079 = vsel %vm1405, %v1983, 0
        %v2082 = vsel %vm1988, %v1315, 0
        %2084 = vmatprep.subr.bf16.mxu0 0
        %2085 = vmatpush1.bf16.msra.mxu0 %v2082
        %2086 = vmatprep.subr.bf16.mxu0 0
        %2087 = vmatpush1.bf16.msra.mxu0 0
        %2088 = vmatprep.subr.bf16.mxu0 0
        %2089 = vmatpush1.bf16.msra.mxu0 0
        %2090 = vmatprep.subr.bf16.mxu0 0
        %2091 = vmatpush1.bf16.msra.mxu0 0
        %2092 = vmatprep.subr.bf16.mxu0 0
        %2093 = vmatpush1.bf16.msra.mxu0 0
        %2094 = vmatprep.subr.bf16.mxu0 0
        %2095 = vmatpush1.bf16.msra.mxu0 0
        %2096 = vmatprep.subr.bf16.mxu0 0
        %2097 = vmatpush1.bf16.msra.mxu0 0
        %2098 = vmatprep.subr.bf16.mxu0 0
        %2099 = vmatpush1.bf16.msra.mxu0 0
        %2100 = vmatprep.subr.bf16.mxu0 0
        %2101 = vmatpush1.bf16.msra.mxu0 0
        %2102 = vmatprep.subr.bf16.mxu0 0
        %2103 = vmatpush1.bf16.msra.mxu0 0
        %2104 = vmatprep.subr.bf16.mxu0 0
        %2105 = vmatpush1.bf16.msra.mxu0 0
        %2106 = vmatprep.subr.bf16.mxu0 0
        %2107 = vmatpush1.bf16.msra.mxu0 0
        %2108 = vmatprep.subr.bf16.mxu0 0
        %2109 = vmatpush1.bf16.msra.mxu0 0
        %2110 = vmatprep.subr.bf16.mxu0 0
        %2111 = vmatpush1.bf16.msra.mxu0 0
        %2112 = vmatprep.subr.bf16.mxu0 0
        %2113 = vmatpush1.bf16.msra.mxu0 0
        %2114 = vmatprep.subr.bf16.mxu0 0
        %2115 = vmatpush1.bf16.msra.mxu0 0
        %2116 = vmatprep.mubr.bf16.mxu0 0
        %2117 = vmatmul.mubr.bf16.gmra.mrb[0].mxu0 %v2079
        %v2118 = vpop.f32.mrb[0].mxu0
        %v2119 = vadd.f32 0.0, %v2118
        %v2120 = vpop.f32.mrb[0].mxu0
        %v2121 = vpop.f32.mrb[0].mxu0
        %v2122 = vpop.f32.mrb[0].mxu0
        %2123 = vdwg.mxu0
        %v2125 = vsel %vm1405, %v1984, 0
        %v2128 = vsel %vm1988, %v1316, 0
        %2130 = vmatprep.subr.bf16.mxu0 0
        %2131 = vmatpush1.bf16.msra.mxu0 %v2128
        %2132 = vmatprep.subr.bf16.mxu0 0
        %2133 = vmatpush1.bf16.msra.mxu0 0
        %2134 = vmatprep.subr.bf16.mxu0 0
        %2135 = vmatpush1.bf16.msra.mxu0 0
        %2136 = vmatprep.subr.bf16.mxu0 0
        %2137 = vmatpush1.bf16.msra.mxu0 0
        %2138 = vmatprep.subr.bf16.mxu0 0
        %2139 = vmatpush1.bf16.msra.mxu0 0
        %2140 = vmatprep.subr.bf16.mxu0 0
        %2141 = vmatpush1.bf16.msra.mxu0 0
        %2142 = vmatprep.subr.bf16.mxu0 0
        %2143 = vmatpush1.bf16.msra.mxu0 0
        %2144 = vmatprep.subr.bf16.mxu0 0
        %2145 = vmatpush1.bf16.msra.mxu0 0
        %2146 = vmatprep.subr.bf16.mxu0 0
        %2147 = vmatpush1.bf16.msra.mxu0 0
        %2148 = vmatprep.subr.bf16.mxu0 0
        %2149 = vmatpush1.bf16.msra.mxu0 0
        %2150 = vmatprep.subr.bf16.mxu0 0
        %2151 = vmatpush1.bf16.msra.mxu0 0
        %2152 = vmatprep.subr.bf16.mxu0 0
        %2153 = vmatpush1.bf16.msra.mxu0 0
        %2154 = vmatprep.subr.bf16.mxu0 0
        %2155 = vmatpush1.bf16.msra.mxu0 0
        %2156 = vmatprep.subr.bf16.mxu0 0
        %2157 = vmatpush1.bf16.msra.mxu0 0
        %2158 = vmatprep.subr.bf16.mxu0 0
        %2159 = vmatpush1.bf16.msra.mxu0 0
        %2160 = vmatprep.subr.bf16.mxu0 0
        %2161 = vmatpush1.bf16.msra.mxu0 0
        %2162 = vmatprep.mubr.bf16.mxu0 0
        %2163 = vmatmul.mubr.bf16.gmra.mrb[0].mxu0 %v2125
        %v2164 = vpop.f32.mrb[0].mxu0
        %v2165 = vadd.f32 0.0, %v2164
        %v2166 = vpop.f32.mrb[0].mxu0
        %v2167 = vpop.f32.mrb[0].mxu0
        %v2168 = vpop.f32.mrb[0].mxu0
        %2169 = vdwg.mxu0
        %v2170 = vadd.f32 %v1961, %v2027
        %v2171 = vadd.f32 %v1962, %v2073
        %v2172 = vadd.f32 %v1963, %v2119
        %v2173 = vadd.f32 %v1964, %v2165
        %v2174 = vrcp.pop %v1977
        %v2175 = vrcp.pop %v1978
        %v2176 = vrcp.pop %v1979
        %v2177 = vrcp.pop %v1980
        %v2178 = vmul.f32 %v2170, %v2174
        %v2179 = vmul.f32 %v2171, %v2175
        %v2180 = vmul.f32 %v2172, %v2176
        %v2181 = vmul.f32 %v2173, %v2177
        %v2182 = vpack.c.bf16 %v2178, %v2178
        %v2183 = vld [vmem:[%s13] sm:$0xf]
        %v2184 = vpack.c.bf16 %v2179, %v2179
        %s2185 = scalar_lea.vmem %s13, 4
        %v2186 = vld [vmem:[%s2185] sm:$0xf]
        %v2188 = vsel %vm1405, %v2184, 0
        %v2191 = vsel %vm1988, %v2186, 0
        %2193 = vmatprep.subr.bf16.mxu0 0
        %2194 = vmatpush1.bf16.msra.mxu0 %v2191
        %2195 = vmatprep.subr.bf16.mxu0 0
        %2196 = vmatpush1.bf16.msra.mxu0 0
        %2197 = vmatprep.subr.bf16.mxu0 0
        %2198 = vmatpush1.bf16.msra.mxu0 0
        %2199 = vmatprep.subr.bf16.mxu0 0
        %2200 = vmatpush1.bf16.msra.mxu0 0
        %2201 = vmatprep.subr.bf16.mxu0 0
        %2202 = vmatpush1.bf16.msra.mxu0 0
        %2203 = vmatprep.subr.bf16.mxu0 0
        %2204 = vmatpush1.bf16.msra.mxu0 0
        %2205 = vmatprep.subr.bf16.mxu0 0
        %2206 = vmatpush1.bf16.msra.mxu0 0
        %2207 = vmatprep.subr.bf16.mxu0 0
        %2208 = vmatpush1.bf16.msra.mxu0 0
        %2209 = vmatprep.subr.bf16.mxu0 0
        %2210 = vmatpush1.bf16.msra.mxu0 0
        %2211 = vmatprep.subr.bf16.mxu0 0
        %2212 = vmatpush1.bf16.msra.mxu0 0
        %2213 = vmatprep.subr.bf16.mxu0 0
        %2214 = vmatpush1.bf16.msra.mxu0 0
        %2215 = vmatprep.subr.bf16.mxu0 0
        %2216 = vmatpush1.bf16.msra.mxu0 0
        %2217 = vmatprep.subr.bf16.mxu0 0
        %2218 = vmatpush1.bf16.msra.mxu0 0
        %2219 = vmatprep.subr.bf16.mxu0 0
        %2220 = vmatpush1.bf16.msra.mxu0 0
        %2221 = vmatprep.subr.bf16.mxu0 0
        %2222 = vmatpush1.bf16.msra.mxu0 0
        %2223 = vmatprep.subr.bf16.mxu0 0
        %2224 = vmatpush1.bf16.msra.mxu0 0
        %2225 = vmatprep.mubr.bf16.mxu0 0
        %2226 = vmatmul.mubr.bf16.gmra.mrb[0].mxu0 %v2188
        %v2227 = vpop.f32.mrb[0].mxu0
        %v2228 = vadd.f32 0.0, %v2227
        %v2229 = vpop.f32.mrb[0].mxu0
        %v2230 = vpop.f32.mrb[0].mxu0
        %v2231 = vpop.f32.mrb[0].mxu0
        %2232 = vdwg.mxu0
        %v2234 = vsel %vm1405, %v2182, 0
        %v2237 = vsel %vm1988, %v2183, 0
        %2239 = vmatprep.subr.bf16.mxu0 0
        %2240 = vmatpush1.bf16.msra.mxu0 %v2237
        %2241 = vmatprep.subr.bf16.mxu0 0
        %2242 = vmatpush1.bf16.msra.mxu0 0
        %2243 = vmatprep.subr.bf16.mxu0 0
        %2244 = vmatpush1.bf16.msra.mxu0 0
        %2245 = vmatprep.subr.bf16.mxu0 0
        %2246 = vmatpush1.bf16.msra.mxu0 0
        %2247 = vmatprep.subr.bf16.mxu0 0
        %2248 = vmatpush1.bf16.msra.mxu0 0
        %2249 = vmatprep.subr.bf16.mxu0 0
        %2250 = vmatpush1.bf16.msra.mxu0 0
        %2251 = vmatprep.subr.bf16.mxu0 0
        %2252 = vmatpush1.bf16.msra.mxu0 0
        %2253 = vmatprep.subr.bf16.mxu0 0
        %2254 = vmatpush1.bf16.msra.mxu0 0
        %2255 = vmatprep.subr.bf16.mxu0 0
        %2256 = vmatpush1.bf16.msra.mxu0 0
        %2257 = vmatprep.subr.bf16.mxu0 0
        %2258 = vmatpush1.bf16.msra.mxu0 0
        %2259 = vmatprep.subr.bf16.mxu0 0
        %2260 = vmatpush1.bf16.msra.mxu0 0
        %2261 = vmatprep.subr.bf16.mxu0 0
        %2262 = vmatpush1.bf16.msra.mxu0 0
        %2263 = vmatprep.subr.bf16.mxu0 0
        %2264 = vmatpush1.bf16.msra.mxu0 0
        %2265 = vmatprep.subr.bf16.mxu0 0
        %2266 = vmatpush1.bf16.msra.mxu0 0
        %2267 = vmatprep.subr.bf16.mxu0 0
        %2268 = vmatpush1.bf16.msra.mxu0 0
        %2269 = vmatprep.subr.bf16.mxu0 0
        %2270 = vmatpush1.bf16.msra.mxu0 0
        %2271 = vmatprep.mubr.bf16.mxu0 0
        %2272 = vmatmul.mubr.bf16.gmra.mrb[0].mxu0 %v2234
        %v2273 = vpop.f32.mrb[0].mxu0
        %v2274 = vadd.f32 %v2228, %v2273
        %v2275 = vpop.f32.mrb[0].mxu0
        %v2276 = vpop.f32.mrb[0].mxu0
        %v2277 = vpop.f32.mrb[0].mxu0
        %2278 = vdwg.mxu0
        %v2279 = vpack.c.bf16 %v2180, %v2180
        %s2280 = scalar_lea.vmem %s13, 8
        %v2281 = vld [vmem:[%s2280] sm:$0xf]
        %v2283 = vsel %vm1405, %v2279, 0
        %v2286 = vsel %vm1988, %v2281, 0
        %2288 = vmatprep.subr.bf16.mxu0 0
        %2289 = vmatpush1.bf16.msra.mxu0 %v2286
        %2290 = vmatprep.subr.bf16.mxu0 0
        %2291 = vmatpush1.bf16.msra.mxu0 0
        %2292 = vmatprep.subr.bf16.mxu0 0
        %2293 = vmatpush1.bf16.msra.mxu0 0
        %2294 = vmatprep.subr.bf16.mxu0 0
        %2295 = vmatpush1.bf16.msra.mxu0 0
        %2296 = vmatprep.subr.bf16.mxu0 0
        %2297 = vmatpush1.bf16.msra.mxu0 0
        %2298 = vmatprep.subr.bf16.mxu0 0
        %2299 = vmatpush1.bf16.msra.mxu0 0
        %2300 = vmatprep.subr.bf16.mxu0 0
        %2301 = vmatpush1.bf16.msra.mxu0 0
        %2302 = vmatprep.subr.bf16.mxu0 0
        %2303 = vmatpush1.bf16.msra.mxu0 0
        %2304 = vmatprep.subr.bf16.mxu0 0
        %2305 = vmatpush1.bf16.msra.mxu0 0
        %2306 = vmatprep.subr.bf16.mxu0 0
        %2307 = vmatpush1.bf16.msra.mxu0 0
        %2308 = vmatprep.subr.bf16.mxu0 0
        %2309 = vmatpush1.bf16.msra.mxu0 0
        %2310 = vmatprep.subr.bf16.mxu0 0
        %2311 = vmatpush1.bf16.msra.mxu0 0
        %2312 = vmatprep.subr.bf16.mxu0 0
        %2313 = vmatpush1.bf16.msra.mxu0 0
        %2314 = vmatprep.subr.bf16.mxu0 0
        %2315 = vmatpush1.bf16.msra.mxu0 0
        %2316 = vmatprep.subr.bf16.mxu0 0
        %2317 = vmatpush1.bf16.msra.mxu0 0
        %2318 = vmatprep.subr.bf16.mxu0 0
        %2319 = vmatpush1.bf16.msra.mxu0 0
        %2320 = vmatprep.mubr.bf16.mxu0 0
        %2321 = vmatmul.mubr.bf16.gmra.mrb[0].mxu0 %v2283
        %v2322 = vpop.f32.mrb[0].mxu0
        %v2323 = vadd.f32 0.0, %v2322
        %v2324 = vpop.f32.mrb[0].mxu0
        %v2325 = vpop.f32.mrb[0].mxu0
        %v2326 = vpop.f32.mrb[0].mxu0
        %2327 = vdwg.mxu0
        %v2328 = vadd.f32 %v2274, %v2323
        %v2329 = vpack.c.bf16 %v2181, %v2181
        %s2330 = scalar_lea.vmem %s13, 12
        %v2331 = vld [vmem:[%s2330] sm:$0xf]
        %v2333 = vsel %vm1405, %v2329, 0
        %v2336 = vsel %vm1988, %v2331, 0
        %2338 = vmatprep.subr.bf16.mxu0 0
        %2339 = vmatpush1.bf16.msra.mxu0 %v2336
        %2340 = vmatprep.subr.bf16.mxu0 0
        %2341 = vmatpush1.bf16.msra.mxu0 0
        %2342 = vmatprep.subr.bf16.mxu0 0
        %2343 = vmatpush1.bf16.msra.mxu0 0
        %2344 = vmatprep.subr.bf16.mxu0 0
        %2345 = vmatpush1.bf16.msra.mxu0 0
        %2346 = vmatprep.subr.bf16.mxu0 0
        %2347 = vmatpush1.bf16.msra.mxu0 0
        %2348 = vmatprep.subr.bf16.mxu0 0
        %2349 = vmatpush1.bf16.msra.mxu0 0
        %2350 = vmatprep.subr.bf16.mxu0 0
        %2351 = vmatpush1.bf16.msra.mxu0 0
        %2352 = vmatprep.subr.bf16.mxu0 0
        %2353 = vmatpush1.bf16.msra.mxu0 0
        %2354 = vmatprep.subr.bf16.mxu0 0
        %2355 = vmatpush1.bf16.msra.mxu0 0
        %2356 = vmatprep.subr.bf16.mxu0 0
        %2357 = vmatpush1.bf16.msra.mxu0 0
        %2358 = vmatprep.subr.bf16.mxu0 0
        %2359 = vmatpush1.bf16.msra.mxu0 0
        %2360 = vmatprep.subr.bf16.mxu0 0
        %2361 = vmatpush1.bf16.msra.mxu0 0
        %2362 = vmatprep.subr.bf16.mxu0 0
        %2363 = vmatpush1.bf16.msra.mxu0 0
        %2364 = vmatprep.subr.bf16.mxu0 0
        %2365 = vmatpush1.bf16.msra.mxu0 0
        %2366 = vmatprep.subr.bf16.mxu0 0
        %2367 = vmatpush1.bf16.msra.mxu0 0
        %2368 = vmatprep.subr.bf16.mxu0 0
        %2369 = vmatpush1.bf16.msra.mxu0 0
        %2370 = vmatprep.mubr.bf16.mxu0 0
        %2371 = vmatmul.mubr.bf16.gmra.mrb[0].mxu0 %v2333
        %v2372 = vpop.f32.mrb[0].mxu0
        %v2373 = vadd.f32 0.0, %v2372
        %v2374 = vpop.f32.mrb[0].mxu0
        %v2375 = vpop.f32.mrb[0].mxu0
        %v2376 = vpop.f32.mrb[0].mxu0
        %2377 = vdwg.mxu0
        %v2378 = vadd.f32 %v2328, %v2373
        %v2379 = vld [vmem:[%s14] sm:$0x1]
        %v2381 = vlaneseq
        %v2382 = vshrl.u32 %v2381, 7
        %v2383 = vsub.s32 0, %v2382
        %v2384 = vrot.slane %v2379, %v2383
        %v2386 = vadd.f32 %v2378, %v2384
        %2387 = vst.msk [vmem:[%s522] sm:$0xff] %vm599, %v2386
        %s2388 = sand.u32 %s372, 1
        %s2389 = scalar_lea.sflag [#allocation3], %s2388
        %s2390 = sand.u32 %s372, 1
        %s2391 = smul.addr %s2390, 8
        %s2392 = scalar_lea.vmem [#allocation2], %s2391
        // Predicated region
        $region81: #{tpu_custom_call.1} parent=79 // pred_check
          %p2393 = pneg %p382
        $region82: #{tpu_custom_call.1} parent=79 // pred_check_branch
          %2395 = sbr.rel (%p2393) target = $region84
        $region83: #{tpu_custom_call.1} parent=79 // pred_region
          %s2397 = ssub.s32 128, 128
          %2398 = vsyncadd %s2389, %s2397
          %s2399 = smul.addr %s29, 128
          %s2400 = scalar_lea.hbm %s15, %s2399
          %s2402 = sshll.u32 %s2392, 4
          %s2403 = int_to_ptr.vmem [resolvable:$true] %s2402
          %2405 = dma.vmem_to_hbm [thread:$0]  %s2403, 128, %s2400, %s2389
        $region84: #{tpu_custom_call.1} parent=79 // pred_fallthru
          _
      $region80: #{tpu_custom_call.1} parent=5 // pred_fallthru
        _
      %p2406 = scmp.le.s32.totalorder 2, %s24
      // Predicated region
      $region85: #{tpu_custom_call.1} parent=5 // pred_check
        %p2407 = pneg %p2406
      $region86: #{tpu_custom_call.1} parent=5 // pred_check_branch
        %2409 = sbr.rel (%p2407) target = $region88
      $region87: #{tpu_custom_call.1} parent=5 // pred_region
        %s2410 = ssub.s32 %s24, 2
        // Predicated region
        $region89: #{tpu_custom_call.1} parent=87 // pred_check
          %p2411 = pneg %p388
        $region90: #{tpu_custom_call.1} parent=87 // pred_check_branch
          %2413 = sbr.rel (%p2411) target = $region92
        $region91: #{tpu_custom_call.1} parent=87 // pred_region
          %s2414 = sand.u32 %s373, 1
          %s2415 = scalar_lea.sflag [#allocation3], %s2414
          %s2416 = sand.u32 %s373, 1
          %s2417 = smul.addr %s2416, 8
          %s2418 = scalar_lea.vmem [#allocation2], %s2417
          %2419 = dma.done %s2415, 128
        $region92: #{tpu_custom_call.1} parent=87 // pred_fallthru
          _
      $region88: #{tpu_custom_call.1} parent=5 // pred_fallthru
        _
    $region6: #{tpu_custom_call.1} parent=1 // loop_footer
      %s28 = sadd.s32 1, %s24
    $region7: #{tpu_custom_call.1} parent=1 // loop_footer_branch
      %23 = sbr.rel target = $region3
    $region8: #{tpu_custom_call.1} parent=1 // loop_exit
      _
    %2420 = vsyncpa [#allocation3], 1
    %s2421 = scalar_lea.sflag [#allocation3], 1
    %2422 = vsyncpa %s2421, 1

</llo_original>
